<compile_context>
chip_gen: v7x
topology: tpu7x:2x2x1
jax: 0.10.0
libtpu: 0.0.40
codegen_flags: <defaults>
</compile_context>

<pallas_src>
import jax
import jax.numpy as jnp
from jax.experimental import pallas as pl
from jax.experimental.pallas import tpu as pltpu

DIM1 = 512
LATENT = 2
IN_X = 784
IN_Y = 10
IN_FEATURES = IN_X + IN_Y    # 794
N_HEADS_OUT = 2 * LATENT     # fused mean/std output width = 4


def cvae_encoder_kernel(x_ref, y_ref, w1x_ref, w1y_ref, b1_ref, wh_ref, bh_ref,
                        out_ref):
    # Hidden layer on the split inputs (no concat needed):
    #   h = relu(x @ w1x + y @ w1y + b1)   -> (TB, 512), f32 accumulation.
    xb = x_ref[...].astype(jnp.bfloat16)
    yb = y_ref[...].astype(jnp.bfloat16)
    h = jnp.dot(xb, w1x_ref[...], preferred_element_type=jnp.float32)
    h = h + jnp.dot(yb, w1y_ref[...], preferred_element_type=jnp.float32)
    h = jnp.maximum(h + b1_ref[...], 0.0)

    # Fused mean/std heads: one (512, 4) matmul, single lane-dense output block.
    z = jnp.dot(h.astype(jnp.bfloat16), wh_ref[...],
                preferred_element_type=jnp.float32)
    out_ref[...] = jnp.maximum(z + bh_ref[...], 0.0)


def _pick_batch_tile(batch, block_batch):
    tb = min(block_batch, batch)
    if tb != batch:
        tb = max(8, (tb // 8) * 8)   # keep tiles sublane-aligned (multiple of 8)
    return tb


def _vmem_limit_bytes(tb):
    f32, bf16 = 4, 2
    # 2x on streamed blocks for the pipeliner's double-buffering.
    acts = 2 * tb * (IN_X + IN_Y) * f32
    outs = 2 * tb * N_HEADS_OUT * f32
    wts = 2 * ((IN_X + IN_Y) * DIM1 + DIM1 * N_HEADS_OUT) * bf16
    bias = 2 * (DIM1 + N_HEADS_OUT) * f32
    hidden = tb * DIM1 * f32
    est = acts + outs + wts + bias + hidden
    # Generous headroom for compiler scratch; capped below v7x's 64 MiB physical.
    return int(min(max(2 * est, 16 << 20), 32 << 20))


def cvae_encoder(x, y, params, *, block_batch=512):
    """x: (B, 784) f32, y: (B, 10) f32. Returns (z_mean, z_std), each (B, 2) f32."""
    w1x, w1y, b1, wh, bh = params
    B = x.shape[0]
    tb = _pick_batch_tile(B, block_batch)
    grid = (pl.cdiv(B, tb),)

    resident = lambda shape: pl.BlockSpec(shape, lambda i: (0, 0))

    out = pl.pallas_call(
        cvae_encoder_kernel,
        out_shape=jax.ShapeDtypeStruct((B, N_HEADS_OUT), jnp.float32),
        grid=grid,
        in_specs=[
            pl.BlockSpec((tb, IN_X), lambda i: (i, 0)),   # x tile, streamed
            pl.BlockSpec((tb, IN_Y), lambda i: (i, 0)),   # y tile, streamed
            resident(w1x.shape),                          # (784, 512) bf16
            resident(w1y.shape),                          # (10, 512)  bf16
            resident(b1.shape),                           # (1, 512)   f32
            resident(wh.shape),                           # (512, 4)   bf16
            resident(bh.shape),                           # (1, 4)     f32
        ],
        out_specs=pl.BlockSpec((tb, N_HEADS_OUT), lambda i: (i, 0)),
        compiler_params=pltpu.CompilerParams(
            dimension_semantics=("parallel",),
            vmem_limit_bytes=_vmem_limit_bytes(tb),
        ),
    )(x, y, w1x, w1y, b1, wh, bh)

    # Split the fused head output into mean/std (cheap wrapper-side slices).
    return out[:, :LATENT], out[:, LATENT:]


def init_params(key):
    """PyTorch-style uniform(+-1/sqrt(fan_in)) init, laid out for the kernel:
       - l1 weight split into w1x (784, 512) and w1y (10, 512), stored bf16
       - mean/std head weights fused into wh (512, 4) bf16, biases bh (1, 4) f32
    """
    k1, k2, k3, k4, k5, k6 = jax.random.split(key, 6)

    def lin(kw, kb, fan_in, fan_out):
        bound = 1.0 / jnp.sqrt(jnp.float32(fan_in))
        w = jax.random.uniform(kw, (fan_in, fan_out), jnp.float32, -bound, bound)
        b = jax.random.uniform(kb, (1, fan_out), jnp.float32, -bound, bound)
        return w, b

    w1, b1 = lin(k1, k2, IN_FEATURES, DIM1)    # Linear(794, 512)
    wm, bm = lin(k3, k4, DIM1, LATENT)         # Linear(512, 2)  (mean head)
    ws, bs = lin(k5, k6, DIM1, LATENT)         # Linear(512, 2)  (std head)

    w1x = w1[:IN_X].astype(jnp.bfloat16)                         # (784, 512)
    w1y = w1[IN_X:].astype(jnp.bfloat16)                         # (10, 512)
    wh = jnp.concatenate([wm, ws], axis=1).astype(jnp.bfloat16)  # (512, 4)
    bh = jnp.concatenate([bm, bs], axis=1)                       # (1, 4)
    return (w1x, w1y, b1, wh, bh)


def reference(x, y, params):
    """Pure-JAX mirror of the kernel math (bf16 inputs/weights, f32 accumulate).

    Matches the PyTorch forward up to the deliberate bf16 weight storage
    (~1e-3 relative), which the perf review accepted for this HBM-bound kernel.
    """
    w1x, w1y, b1, wh, bh = params
    bf = lambda a: a.astype(jnp.bfloat16).astype(jnp.float32)
    h = jnp.maximum(bf(x) @ bf(w1x) + bf(y) @ bf(w1y) + b1, 0.0)
    z = jnp.maximum(bf(h) @ bf(wh) + bh, 0.0)
    return z[:, :LATENT], z[:, LATENT:]


if __name__ == "__main__":
    key = jax.random.PRNGKey(0)
    kx, ky, kp = jax.random.split(key, 3)

    B = 16  # small demo batch; block_batch=8 exercises a 2-step batch grid
    x = jax.random.normal(kx, (B, IN_X), jnp.float32)   # flattened 28x28 image
    y = jax.random.normal(ky, (B, IN_Y), jnp.float32)   # 10-class condition

    params = init_params(kp)

    z_mean, z_std = cvae_encoder(x, y, params, block_batch=8)
    z_mean = jax.block_until_ready(z_mean)
    z_std = jax.block_until_ready(z_std)

    # Verify against the pure-JAX reference.
    ref_mean, ref_std = reference(x, y, params)
    assert z_mean.shape == (B, LATENT) and z_std.shape == (B, LATENT)
    assert jnp.allclose(z_mean, ref_mean, atol=2e-3, rtol=2e-3), \
        float(jnp.max(jnp.abs(z_mean - ref_mean)))
    assert jnp.allclose(z_std, ref_std, atol=2e-3, rtol=2e-3), \
        float(jnp.max(jnp.abs(z_std - ref_std)))

    print("KERNEL_OK")
</pallas_src>

<mosaic_0001>
module attributes {stable_mosaic.version = 11 : i64} {
  func.func @cvae_encoder_kernel(%arg0: i32, %arg1: memref<8x784xf32, #tpu.memory_space<vmem>>, %arg2: memref<8x10xf32, #tpu.memory_space<vmem>>, %arg3: memref<784x512xbf16, #tpu.memory_space<vmem>>, %arg4: memref<10x512xbf16, #tpu.memory_space<vmem>>, %arg5: memref<1x512xf32, #tpu.memory_space<vmem>>, %arg6: memref<512x4xbf16, #tpu.memory_space<vmem>>, %arg7: memref<1x4xf32, #tpu.memory_space<vmem>>, %arg8: memref<8x4xf32, #tpu.memory_space<vmem>>) attributes {dimension_semantics = [#tpu.dimension_semantics<parallel>], iteration_bounds = array<i64: 2>, scalar_prefetch = 0 : i64, scratch_operands = 0 : i64, tpu.core_type = #tpu.core_type<tc>, window_params = [{transform_indices = @transform_0, window_bounds = array<i64: 8, 784>}, {transform_indices = @transform_1, window_bounds = array<i64: 8, 10>}, {pipeline_mode = #tpu.pipeline_mode<synchronous>, transform_indices = @transform_2, window_bounds = array<i64: 784, 512>}, {pipeline_mode = #tpu.pipeline_mode<synchronous>, transform_indices = @transform_3, window_bounds = array<i64: 10, 512>}, {pipeline_mode = #tpu.pipeline_mode<synchronous>, transform_indices = @transform_4, window_bounds = array<i64: 1, 512>}, {pipeline_mode = #tpu.pipeline_mode<synchronous>, transform_indices = @transform_5, window_bounds = array<i64: 512, 4>}, {pipeline_mode = #tpu.pipeline_mode<synchronous>, transform_indices = @transform_6, window_bounds = array<i64: 1, 4>}, {transform_indices = @transform_7, window_bounds = array<i64: 8, 4>}]} {
    %c0 = arith.constant 0 : index
    %c0_0 = arith.constant 0 : index
    %0 = vector.load %arg1[%c0, %c0_0] : memref<8x784xf32, #tpu.memory_space<vmem>>, vector<8x784xf32>
    %1 = arith.truncf %0 : vector<8x784xf32> to vector<8x784xbf16>
    %c0_1 = arith.constant 0 : index
    %c0_2 = arith.constant 0 : index
    %2 = vector.load %arg2[%c0_1, %c0_2] : memref<8x10xf32, #tpu.memory_space<vmem>>, vector<8x10xf32>
    %3 = arith.truncf %2 : vector<8x10xf32> to vector<8x10xbf16>
    %c0_3 = arith.constant 0 : index
    %c0_4 = arith.constant 0 : index
    %4 = vector.load %arg3[%c0_3, %c0_4] : memref<784x512xbf16, #tpu.memory_space<vmem>>, vector<784x512xbf16>
    %cst = arith.constant dense<0.000000e+00> : vector<8x512xf32>
    %5 = tpu.matmul %1, %4, %cst {dimension_numbers = #tpu.dot_dimension_numbers<[1], [0], [0], [1], [0, 0, 1, 1], [], []>} : vector<8x784xbf16>, vector<784x512xbf16>, vector<8x512xf32> -> vector<8x512xf32>
    %c0_5 = arith.constant 0 : index
    %c0_6 = arith.constant 0 : index
    %6 = vector.load %arg4[%c0_5, %c0_6] : memref<10x512xbf16, #tpu.memory_space<vmem>>, vector<10x512xbf16>
    %cst_7 = arith.constant dense<0.000000e+00> : vector<8x512xf32>
    %7 = tpu.matmul %3, %6, %cst_7 {dimension_numbers = #tpu.dot_dimension_numbers<[1], [0], [0], [1], [0, 0, 1, 1], [], []>} : vector<8x10xbf16>, vector<10x512xbf16>, vector<8x512xf32> -> vector<8x512xf32>
    %8 = arith.addf %5, %7 : vector<8x512xf32>
    %c0_8 = arith.constant 0 : index
    %c0_9 = arith.constant 0 : index
    %9 = vector.load %arg5[%c0_8, %c0_9] : memref<1x512xf32, #tpu.memory_space<vmem>>, vector<1x512xf32>
    %10 = vector.broadcast %9 : vector<1x512xf32> to vector<8x512xf32>
    %11 = arith.addf %8, %10 : vector<8x512xf32>
    %cst_10 = arith.constant 0.000000e+00 : f32
    %12 = vector.broadcast %cst_10 : f32 to vector<8x512xf32>
    %13 = arith.maximumf %11, %12 : vector<8x512xf32>
    %14 = arith.truncf %13 : vector<8x512xf32> to vector<8x512xbf16>
    %c0_11 = arith.constant 0 : index
    %c0_12 = arith.constant 0 : index
    %15 = vector.load %arg6[%c0_11, %c0_12] : memref<512x4xbf16, #tpu.memory_space<vmem>>, vector<512x4xbf16>
    %cst_13 = arith.constant dense<0.000000e+00> : vector<8x4xf32>
    %16 = tpu.matmul %14, %15, %cst_13 {dimension_numbers = #tpu.dot_dimension_numbers<[1], [0], [0], [1], [0, 0, 1, 1], [], []>} : vector<8x512xbf16>, vector<512x4xbf16>, vector<8x4xf32> -> vector<8x4xf32>
    %c0_14 = arith.constant 0 : index
    %c0_15 = arith.constant 0 : index
    %17 = vector.load %arg7[%c0_14, %c0_15] : memref<1x4xf32, #tpu.memory_space<vmem>>, vector<1x4xf32>
    %18 = vector.broadcast %17 : vector<1x4xf32> to vector<8x4xf32>
    %19 = arith.addf %16, %18 : vector<8x4xf32>
    %cst_16 = arith.constant 0.000000e+00 : f32
    %20 = vector.broadcast %cst_16 : f32 to vector<8x4xf32>
    %21 = arith.maximumf %19, %20 : vector<8x4xf32>
    %c0_17 = arith.constant 0 : index
    %c0_18 = arith.constant 0 : index
    %22 = vector.load %arg8[%c0_17, %c0_18] : memref<8x4xf32, #tpu.memory_space<vmem>>, vector<8x4xf32>
    tpu.vector_store %arg8[%c0_17, %c0_18], %21 {strides = array<i32>} : memref<8x4xf32, #tpu.memory_space<vmem>>, vector<8x4xf32>,
    return
  }
  func.func @transform_0(%arg0: i32) -> (i32, i32) {
    %c0_i32 = arith.constant 0 : i32
    %c0_i32_0 = arith.constant 0 : i32
    return %arg0, %c0_i32 : i32, i32
  }
  func.func @transform_1(%arg0: i32) -> (i32, i32) {
    %c0_i32 = arith.constant 0 : i32
    %c0_i32_0 = arith.constant 0 : i32
    return %arg0, %c0_i32 : i32, i32
  }
  func.func @transform_2(%arg0: i32) -> (i32, i32) {
    %c0_i32 = arith.constant 0 : i32
    %c0_i32_0 = arith.constant 0 : i32
    %c0_i32_1 = arith.constant 0 : i32
    return %c0_i32, %c0_i32_0 : i32, i32
  }
  func.func @transform_3(%arg0: i32) -> (i32, i32) {
    %c0_i32 = arith.constant 0 : i32
    %c0_i32_0 = arith.constant 0 : i32
    %c0_i32_1 = arith.constant 0 : i32
    return %c0_i32, %c0_i32_0 : i32, i32
  }
  func.func @transform_4(%arg0: i32) -> (i32, i32) {
    %c0_i32 = arith.constant 0 : i32
    %c0_i32_0 = arith.constant 0 : i32
    %c0_i32_1 = arith.constant 0 : i32
    return %c0_i32, %c0_i32_0 : i32, i32
  }
  func.func @transform_5(%arg0: i32) -> (i32, i32) {
    %c0_i32 = arith.constant 0 : i32
    %c0_i32_0 = arith.constant 0 : i32
    %c0_i32_1 = arith.constant 0 : i32
    return %c0_i32, %c0_i32_0 : i32, i32
  }
  func.func @transform_6(%arg0: i32) -> (i32, i32) {
    %c0_i32 = arith.constant 0 : i32
    %c0_i32_0 = arith.constant 0 : i32
    %c0_i32_1 = arith.constant 0 : i32
    return %c0_i32, %c0_i32_0 : i32, i32
  }
  func.func @transform_7(%arg0: i32) -> (i32, i32) {
    %c0_i32 = arith.constant 0 : i32
    %c0_i32_0 = arith.constant 0 : i32
    return %arg0, %c0_i32 : i32, i32
  }
}

</mosaic_0001>

<llo_original>
// kernel: tpu_custom_call.1
$region0: #{tpu_custom_call.1}
  #allocation0 [shape = 'u32[]', space=smem, size = 0x4, offset = 0x4, fixed_abs, tag = 'smem constant byte address 0x4 - core index']
  #allocation1 [shape = 'u32[144,128]{1,0:T(1,128)}', space=vmem, size = 0x12000, scoped, tag = 'internal scratch']
  %s0 = inlined_call_operand.vmem [shape: f32[16,784], index: 0, kind: input, shape index: {}]
  %s1 = inlined_call_operand.vmem [shape: f32[16,10], index: 1, kind: input, shape index: {}]
  %s2 = inlined_call_operand.hbm [shape: bf16[784,512], index: 2, kind: input, shape index: {}]
  %s3 = inlined_call_operand.vmem [shape: bf16[10,512], index: 3, kind: input, shape index: {}]
  %s4 = inlined_call_operand.vmem [shape: f32[1,512], index: 4, kind: input, shape index: {}]
  %s5 = inlined_call_operand.vmem [shape: bf16[512,4], index: 5, kind: input, shape index: {}]
  %s6 = inlined_call_operand.vmem [shape: f32[1,4], index: 6, kind: input, shape index: {}]
  %s7 = inlined_call_operand.vmem [shape: f32[16,4], index: 7, kind: output, shape index: {}]
  %s8 = sld [smem:[#allocation0]]
  $region65: #{tpu_custom_call.1} parent=0
    _
  %s10 = ssub.s32 1, %s8
  %s11 = scalar_select 0, %s10, %s8
  $region1: #{tpu_custom_call.1} parent=0
    #allocation2 [shape = 'u8[802816]{0}', space=vmem, size = 0xc4000, scoped, tag = 'input window, operand 2, single buffered']
    #allocation3 [shape = 's32[2]{0}', space=sflag, size = 0x8, scoped, tag = 'scoped memory for tpu_custom_call.1']
    %12 = vsyncpa [#allocation3], 0
    loop: start=0, step=1, limit=4
    $region2: #{tpu_custom_call.1} parent=1 // loop_pre_header
      _
    $region3: #{tpu_custom_call.1} parent=1 // loop_header
      %s14 = sphi 0, %s18
      %p15 = scmp.ge.s32.totalorder %s14, 4
      %s24 = sphi 0, %s26
      %s27 = sphi 0, %s24
      %s28 = sphi 0, %s27
      %s44 = sphi 0, %s28
      %s50 = sphi 0, %s52
      %s53 = sphi 0, %s50
      %s54 = sphi 0, %s53
      %s70 = sphi 0, %s54
      %s74 = sphi 0, %s74
      %s76 = sphi 0, %s74
      %s77 = sphi 0, %s76
      %s91 = sphi 0, %s77
      %s95 = sphi 0, %s95
      %s97 = sphi 0, %s95
      %s98 = sphi 0, %s97
      %s112 = sphi 0, %s98
      %s116 = sphi 0, %s116
      %s118 = sphi 0, %s116
      %s119 = sphi 0, %s118
      %s133 = sphi 0, %s119
      %s137 = sphi 0, %s137
      %s139 = sphi 0, %s137
      %s140 = sphi 0, %s139
      %s154 = sphi 0, %s140
      %s158 = sphi 0, %s158
      %s160 = sphi 0, %s158
      %s161 = sphi 0, %s160
      %s175 = sphi 0, %s161
      %s181 = sphi 0, %s183
      %s184 = sphi 0, %s181
      %s185 = sphi 0, %s184
      %s201 = sphi 0, %s185
    $region4: #{tpu_custom_call.1} parent=1 // loop_header_branch
      %17 = sbr.rel (%p15) target = $region8
    $region5: #{tpu_custom_call.1} parent=1 // loop_body
      %s19 = ssub.s32 %s14, 1
      %s20 = ssub.s32 %s14, 2
      %s21 = sadd.s32 %s14, 1
      %s22 = ssub.s32 %s14, %s21
      %p23 = scmp.eq.s32.totalorder %s22, 0
      %s25 = sadd.s32 %s24, 1
      %s26 = scalar_select %p23, %s24, %s25
      %p29 = pneg %p23
      %p30 = scmp.eq.s32.totalorder %s14, 1
      %p31 = por %p29, %p30
      %p32 = scmp.ne.s32.totalorder %s24, %s27
      %p33 = scmp.eq.s32.totalorder %s14, 0
      %p34 = por %p32, %p33
      %p35 = scmp.ne.s32.totalorder %s24, %s27
      %p36 = scmp.eq.s32.totalorder %s19, 1
      %p37 = por %p35, %p36
      %p38 = scmp.ne.s32.totalorder %s27, %s28
      %p39 = scmp.eq.s32.totalorder %s19, 0
      %p40 = por %p38, %p39
      %p41 = scmp.ne.s32.totalorder %s27, %s28
      %p42 = scmp.eq.s32.totalorder %s20, 1
      %p43 = por %p41, %p42
      %p45 = scmp.ne.s32.totalorder %s28, %s44
      %p46 = scmp.eq.s32.totalorder %s20, 0
      %p47 = por %p45, %p46
      %s48 = ssub.s32 %s14, %s21
      %p49 = scmp.eq.s32.totalorder %s48, 0
      %s51 = sadd.s32 %s50, 1
      %s52 = scalar_select %p49, %s50, %s51
      %p55 = pneg %p49
      %p56 = scmp.eq.s32.totalorder %s14, 1
      %p57 = por %p55, %p56
      %p58 = scmp.ne.s32.totalorder %s50, %s53
      %p59 = scmp.eq.s32.totalorder %s14, 0
      %p60 = por %p58, %p59
      %p61 = scmp.ne.s32.totalorder %s50, %s53
      %p62 = scmp.eq.s32.totalorder %s19, 1
      %p63 = por %p61, %p62
      %p64 = scmp.ne.s32.totalorder %s53, %s54
      %p65 = scmp.eq.s32.totalorder %s19, 0
      %p66 = por %p64, %p65
      %p67 = scmp.ne.s32.totalorder %s53, %s54
      %p68 = scmp.eq.s32.totalorder %s20, 1
      %p69 = por %p67, %p68
      %p71 = scmp.ne.s32.totalorder %s54, %s70
      %p72 = scmp.eq.s32.totalorder %s20, 0
      %p73 = por %p71, %p72
      %s75 = sadd.s32 %s74, 1
      %p78 = scmp.eq.s32.totalorder %s14, 1
      %p79 = scmp.ne.s32.totalorder %s74, %s76
      %p80 = scmp.eq.s32.totalorder %s14, 0
      %p81 = por %p79, %p80
      %p82 = scmp.ne.s32.totalorder %s74, %s76
      %p83 = scmp.eq.s32.totalorder %s19, 1
      %p84 = por %p82, %p83
      %p85 = scmp.ne.s32.totalorder %s76, %s77
      %p86 = scmp.eq.s32.totalorder %s19, 0
      %p87 = por %p85, %p86
      %p88 = scmp.ne.s32.totalorder %s76, %s77
      %p89 = scmp.eq.s32.totalorder %s20, 1
      %p90 = por %p88, %p89
      %p92 = scmp.ne.s32.totalorder %s77, %s91
      %p93 = scmp.eq.s32.totalorder %s20, 0
      %p94 = por %p92, %p93
      %s96 = sadd.s32 %s95, 1
      %p99 = scmp.eq.s32.totalorder %s14, 1
      %p100 = scmp.ne.s32.totalorder %s95, %s97
      %p101 = scmp.eq.s32.totalorder %s14, 0
      %p102 = por %p100, %p101
      %p103 = scmp.ne.s32.totalorder %s95, %s97
      %p104 = scmp.eq.s32.totalorder %s19, 1
      %p105 = por %p103, %p104
      %p106 = scmp.ne.s32.totalorder %s97, %s98
      %p107 = scmp.eq.s32.totalorder %s19, 0
      %p108 = por %p106, %p107
      %p109 = scmp.ne.s32.totalorder %s97, %s98
      %p110 = scmp.eq.s32.totalorder %s20, 1
      %p111 = por %p109, %p110
      %p113 = scmp.ne.s32.totalorder %s98, %s112
      %p114 = scmp.eq.s32.totalorder %s20, 0
      %p115 = por %p113, %p114
      %s117 = sadd.s32 %s116, 1
      %p120 = scmp.eq.s32.totalorder %s14, 1
      %p121 = scmp.ne.s32.totalorder %s116, %s118
      %p122 = scmp.eq.s32.totalorder %s14, 0
      %p123 = por %p121, %p122
      %p124 = scmp.ne.s32.totalorder %s116, %s118
      %p125 = scmp.eq.s32.totalorder %s19, 1
      %p126 = por %p124, %p125
      %p127 = scmp.ne.s32.totalorder %s118, %s119
      %p128 = scmp.eq.s32.totalorder %s19, 0
      %p129 = por %p127, %p128
      %p130 = scmp.ne.s32.totalorder %s118, %s119
      %p131 = scmp.eq.s32.totalorder %s20, 1
      %p132 = por %p130, %p131
      %p134 = scmp.ne.s32.totalorder %s119, %s133
      %p135 = scmp.eq.s32.totalorder %s20, 0
      %p136 = por %p134, %p135
      %s138 = sadd.s32 %s137, 1
      %p141 = scmp.eq.s32.totalorder %s14, 1
      %p142 = scmp.ne.s32.totalorder %s137, %s139
      %p143 = scmp.eq.s32.totalorder %s14, 0
      %p144 = por %p142, %p143
      %p145 = scmp.ne.s32.totalorder %s137, %s139
      %p146 = scmp.eq.s32.totalorder %s19, 1
      %p147 = por %p145, %p146
      %p148 = scmp.ne.s32.totalorder %s139, %s140
      %p149 = scmp.eq.s32.totalorder %s19, 0
      %p150 = por %p148, %p149
      %p151 = scmp.ne.s32.totalorder %s139, %s140
      %p152 = scmp.eq.s32.totalorder %s20, 1
      %p153 = por %p151, %p152
      %p155 = scmp.ne.s32.totalorder %s140, %s154
      %p156 = scmp.eq.s32.totalorder %s20, 0
      %p157 = por %p155, %p156
      %s159 = sadd.s32 %s158, 1
      %p162 = scmp.eq.s32.totalorder %s14, 1
      %p163 = scmp.ne.s32.totalorder %s158, %s160
      %p164 = scmp.eq.s32.totalorder %s14, 0
      %p165 = por %p163, %p164
      %p166 = scmp.ne.s32.totalorder %s158, %s160
      %p167 = scmp.eq.s32.totalorder %s19, 1
      %p168 = por %p166, %p167
      %p169 = scmp.ne.s32.totalorder %s160, %s161
      %p170 = scmp.eq.s32.totalorder %s19, 0
      %p171 = por %p169, %p170
      %p172 = scmp.ne.s32.totalorder %s160, %s161
      %p173 = scmp.eq.s32.totalorder %s20, 1
      %p174 = por %p172, %p173
      %p176 = scmp.ne.s32.totalorder %s161, %s175
      %p177 = scmp.eq.s32.totalorder %s20, 0
      %p178 = por %p176, %p177
      %s179 = ssub.s32 %s14, %s21
      %p180 = scmp.eq.s32.totalorder %s179, 0
      %s182 = sadd.s32 %s181, 1
      %s183 = scalar_select %p180, %s181, %s182
      %p186 = pneg %p180
      %p187 = scmp.eq.s32.totalorder %s14, 1
      %p188 = por %p186, %p187
      %p189 = scmp.ne.s32.totalorder %s181, %s184
      %p190 = scmp.eq.s32.totalorder %s14, 0
      %p191 = por %p189, %p190
      %p192 = scmp.ne.s32.totalorder %s181, %s184
      %p193 = scmp.eq.s32.totalorder %s19, 1
      %p194 = por %p192, %p193
      %p195 = scmp.ne.s32.totalorder %s184, %s185
      %p196 = scmp.eq.s32.totalorder %s19, 0
      %p197 = por %p195, %p196
      %p198 = scmp.ne.s32.totalorder %s184, %s185
      %p199 = scmp.eq.s32.totalorder %s20, 1
      %p200 = por %p198, %p199
      %p202 = scmp.ne.s32.totalorder %s185, %s201
      %p203 = scmp.eq.s32.totalorder %s20, 0
      %p204 = por %p202, %p203
      %p205 = scmp.le.s32.totalorder 1, %s14
      %p206 = scmp.lt.s32.totalorder %s14, 3
      %p207 = pnand %p205, %p206
      %p208 = pneg %p207
      // Predicated region
      $region9: #{tpu_custom_call.1} parent=5 // pred_check
        _
      $region10: #{tpu_custom_call.1} parent=5 // pred_check_branch
        %210 = sbr.rel (%p207) target = $region12
      $region11: #{tpu_custom_call.1} parent=5 // pred_region
        %s211 = ssub.s32 %s14, 1
        // Predicated region
        $region13: #{tpu_custom_call.1} parent=11 // pred_check
          %p212 = pneg %p87
        $region14: #{tpu_custom_call.1} parent=11 // pred_check_branch
          %214 = sbr.rel (%p212) target = $region16
        $region15: #{tpu_custom_call.1} parent=11 // pred_region
          %s216 = ssub.s32 25088, 25088
          %217 = vsyncadd [#allocation3], %s216
          %s218 = sshll.u32 [#allocation2], 4
          %s219 = int_to_ptr.vmem [resolvable:$true] %s218
          %224 = dma.hbm_to_vmem [thread:$0]  %s2, 25088, %s219, [#allocation3], 256, 256, 16
        $region16: #{tpu_custom_call.1} parent=11 // pred_fallthru
          _
        // Predicated region
        $region17: #{tpu_custom_call.1} parent=11 // pred_check
          %p225 = pneg %p108
        $region18: #{tpu_custom_call.1} parent=11 // pred_check_branch
          %227 = sbr.rel (%p225) target = $region20
        $region19: #{tpu_custom_call.1} parent=11 // pred_region
          _
        $region20: #{tpu_custom_call.1} parent=11 // pred_fallthru
          _
        // Predicated region
        $region21: #{tpu_custom_call.1} parent=11 // pred_check
          %p228 = pneg %p129
        $region22: #{tpu_custom_call.1} parent=11 // pred_check_branch
          %230 = sbr.rel (%p228) target = $region24
        $region23: #{tpu_custom_call.1} parent=11 // pred_region
          _
        $region24: #{tpu_custom_call.1} parent=11 // pred_fallthru
          _
        // Predicated region
        $region25: #{tpu_custom_call.1} parent=11 // pred_check
          %p231 = pneg %p150
        $region26: #{tpu_custom_call.1} parent=11 // pred_check_branch
          %233 = sbr.rel (%p231) target = $region28
        $region27: #{tpu_custom_call.1} parent=11 // pred_region
          _
        $region28: #{tpu_custom_call.1} parent=11 // pred_fallthru
          _
        // Predicated region
        $region29: #{tpu_custom_call.1} parent=11 // pred_check
          %p234 = pneg %p171
        $region30: #{tpu_custom_call.1} parent=11 // pred_check_branch
          %236 = sbr.rel (%p234) target = $region32
        $region31: #{tpu_custom_call.1} parent=11 // pred_region
          _
        $region32: #{tpu_custom_call.1} parent=11 // pred_fallthru
          _
      $region12: #{tpu_custom_call.1} parent=5 // pred_fallthru
        _
      %p237 = scmp.lt.s32.totalorder %s14, 2
      // Predicated region
      $region33: #{tpu_custom_call.1} parent=5 // pred_check
        %p238 = pneg %p237
      $region34: #{tpu_custom_call.1} parent=5 // pred_check_branch
        %240 = sbr.rel (%p238) target = $region36
      $region35: #{tpu_custom_call.1} parent=5 // pred_region
        // Predicated region
        $region37: #{tpu_custom_call.1} parent=35 // pred_check
          %p241 = pneg %p34
        $region38: #{tpu_custom_call.1} parent=35 // pred_check_branch
          %243 = sbr.rel (%p241) target = $region40
        $region39: #{tpu_custom_call.1} parent=35 // pred_region
          %p244 = scmp.lt.s32.totalorder %s14, 1
          %s245 = scalar_select %p244, %s14, 1
          %s246 = smul.addr %s245, 7
          %s247 = smul.addr %s246, 8
          %s248 = scalar_lea.vmem %s0, %s247
        $region40: #{tpu_custom_call.1} parent=35 // pred_fallthru
          _
        // Predicated region
        $region41: #{tpu_custom_call.1} parent=35 // pred_check
          %p249 = pneg %p60
        $region42: #{tpu_custom_call.1} parent=35 // pred_check_branch
          %251 = sbr.rel (%p249) target = $region44
        $region43: #{tpu_custom_call.1} parent=35 // pred_region
          %p252 = scmp.lt.s32.totalorder %s14, 1
          %s253 = scalar_select %p252, %s14, 1
          %s254 = smul.addr %s253, 8
          %s255 = scalar_lea.vmem %s1, %s254
        $region44: #{tpu_custom_call.1} parent=35 // pred_fallthru
          _
      $region36: #{tpu_custom_call.1} parent=5 // pred_fallthru
        _
      %p256 = scmp.le.s32.totalorder 1, %s14
      %p257 = scmp.lt.s32.totalorder %s14, 3
      %p258 = pnand %p256, %p257
      %p259 = pneg %p258
      // Predicated region
      $region45: #{tpu_custom_call.1} parent=5 // pred_check
        _
      $region46: #{tpu_custom_call.1} parent=5 // pred_check_branch
        %261 = sbr.rel (%p258) target = $region48
      $region47: #{tpu_custom_call.1} parent=5 // pred_region
        %s262 = ssub.s32 %s14, 1
        // Predicated region
        $region49: #{tpu_custom_call.1} parent=47 // pred_check
          %p263 = pneg %p87
        $region50: #{tpu_custom_call.1} parent=47 // pred_check_branch
          %265 = sbr.rel (%p263) target = $region52
        $region51: #{tpu_custom_call.1} parent=47 // pred_region
          %266 = dma.done [#allocation3], 25088
        $region52: #{tpu_custom_call.1} parent=47 // pred_fallthru
          _
        %p267 = scmp.lt.s32.totalorder %s19, 1
        %s268 = scalar_select %p267, %s19, 1
        %s269 = smul.addr %s268, 7
        %s270 = smul.addr %s269, 8
        %s271 = scalar_lea.vmem %s0, %s270
        %p272 = pneg %p40
        %p273 = pneg %p37
        %p274 = scmp.lt.s32.totalorder %s19, 1
        %s275 = scalar_select %p274, %s19, 1
        %s276 = smul.addr %s275, 8
        %s277 = scalar_lea.vmem %s1, %s276
        %p278 = pneg %p66
        %p279 = pneg %p63
        %p280 = pneg %p87
        %p281 = pneg %p84
        %p282 = pneg %p108
        %p283 = pneg %p105
        %p284 = pneg %p129
        %p285 = pneg %p126
        %p286 = pneg %p150
        %p287 = pneg %p147
        %p288 = pneg %p171
        %p289 = pneg %p168
        %p290 = pneg %p197
        %p291 = pneg %p194
        %p292 = scmp.lt.s32.totalorder %s19, 1
        %s293 = scalar_select %p292, %s19, 1
        %s294 = smul.addr %s293, 8
        %s295 = scalar_lea.vmem %s7, %s294
        %p296 = scmp.lt.s32.totalorder %s19, 1
        %s297 = scalar_select %p296, %s19, 1
        %s298 = smul.addr %s297, 7
        %s299 = smul.addr %s298, 8
        %s300 = scalar_lea.vmem %s0, %s299
        %p301 = scmp.lt.s32.totalorder %s19, 1
        %s302 = scalar_select %p301, %s19, 1
        %s303 = smul.addr %s302, 8
        %s304 = scalar_lea.vmem %s1, %s303
        %p305 = scmp.lt.s32.totalorder %s19, 1
        %s306 = scalar_select %p305, %s19, 1
        %s307 = smul.addr %s306, 8
        %s308 = scalar_lea.vmem %s7, %s307
        %v310 = vld [vmem:[%s300] sm:$0xff]
        %v311 = vld [vmem:[%s300 + $0x8] sm:$0xff]
        %v312 = vld [vmem:[%s300 + $0x10] sm:$0xff]
        %v313 = vld [vmem:[%s300 + $0x18] sm:$0xff]
        %v314 = vld [vmem:[%s300 + $0x20] sm:$0xff]
        %v315 = vld [vmem:[%s300 + $0x28] sm:$0xff]
        %v316 = vld [vmem:[%s300 + $0x30] sm:$0xff]
        %v317 = vpack.c.bf16 %v310, %v310
        %v318 = vpack.c.bf16 %v311, %v311
        %v319 = vpack.c.bf16 %v312, %v312
        %v320 = vpack.c.bf16 %v313, %v313
        %v321 = vpack.c.bf16 %v314, %v314
        %v322 = vpack.c.bf16 %v315, %v315
        %v323 = vpack.c.bf16 %v316, %v316
        %v324 = vld [vmem:[%s304] sm:$0xff]
        %v325 = vpack.c.bf16 %v324, %v324
        %v326 = vld [vmem:[#allocation2] sm:$0xff]
        %v327 = vld [vmem:[#allocation2 + $0x8] sm:$0xff]
        %v328 = vld [vmem:[#allocation2 + $0x10] sm:$0xff]
        %v329 = vld [vmem:[#allocation2 + $0x18] sm:$0xff]
        %v330 = vld [vmem:[#allocation2 + $0x20] sm:$0xff]
        %v331 = vld [vmem:[#allocation2 + $0x28] sm:$0xff]
        %v332 = vld [vmem:[#allocation2 + $0x30] sm:$0xff]
        %v333 = vld [vmem:[#allocation2 + $0x38] sm:$0xff]
        %v334 = vld [vmem:[#allocation2 + $0x40] sm:$0xff]
        %v335 = vld [vmem:[#allocation2 + $0x48] sm:$0xff]
        %v336 = vld [vmem:[#allocation2 + $0x50] sm:$0xff]
        %v337 = vld [vmem:[#allocation2 + $0x58] sm:$0xff]
        %v338 = vld [vmem:[#allocation2 + $0x60] sm:$0xff]
        %v339 = vld [vmem:[#allocation2 + $0x68] sm:$0xff]
        %v340 = vld [vmem:[#allocation2 + $0x70] sm:$0xff]
        %v341 = vld [vmem:[#allocation2 + $0x78] sm:$0xff]
        %v342 = vld [vmem:[#allocation2 + $0x80] sm:$0xff]
        %v343 = vld [vmem:[#allocation2 + $0x88] sm:$0xff]
        %v344 = vld [vmem:[#allocation2 + $0x90] sm:$0xff]
        %v345 = vld [vmem:[#allocation2 + $0x98] sm:$0xff]
        %v346 = vld [vmem:[#allocation2 + $0xa0] sm:$0xff]
        %v347 = vld [vmem:[#allocation2 + $0xa8] sm:$0xff]
        %v348 = vld [vmem:[#allocation2 + $0xb0] sm:$0xff]
        %v349 = vld [vmem:[#allocation2 + $0xb8] sm:$0xff]
        %v350 = vld [vmem:[#allocation2 + $0xc0] sm:$0xff]
        %v351 = vld [vmem:[#allocation2 + $0xc8] sm:$0xff]
        %v352 = vld [vmem:[#allocation2 + $0xd0] sm:$0xff]
        %v353 = vld [vmem:[#allocation2 + $0xd8] sm:$0xff]
        %v354 = vld [vmem:[#allocation2 + $0xe0] sm:$0xff]
        %v355 = vld [vmem:[#allocation2 + $0xe8] sm:$0xff]
        %v356 = vld [vmem:[#allocation2 + $0xf0] sm:$0xff]
        %v357 = vld [vmem:[#allocation2 + $0xf8] sm:$0xff]
        %v358 = vld [vmem:[#allocation2 + $0x100] sm:$0xff]
        %v359 = vld [vmem:[#allocation2 + $0x108] sm:$0xff]
        %v360 = vld [vmem:[#allocation2 + $0x110] sm:$0xff]
        %v361 = vld [vmem:[#allocation2 + $0x118] sm:$0xff]
        %v362 = vld [vmem:[#allocation2 + $0x120] sm:$0xff]
        %v363 = vld [vmem:[#allocation2 + $0x128] sm:$0xff]
        %v364 = vld [vmem:[#allocation2 + $0x130] sm:$0xff]
        %v365 = vld [vmem:[#allocation2 + $0x138] sm:$0xff]
        %v366 = vld [vmem:[#allocation2 + $0x140] sm:$0xff]
        %v367 = vld [vmem:[#allocation2 + $0x148] sm:$0xff]
        %v368 = vld [vmem:[#allocation2 + $0x150] sm:$0xff]
        %v369 = vld [vmem:[#allocation2 + $0x158] sm:$0xff]
        %v370 = vld [vmem:[#allocation2 + $0x160] sm:$0xff]
        %v371 = vld [vmem:[#allocation2 + $0x168] sm:$0xff]
        %v372 = vld [vmem:[#allocation2 + $0x170] sm:$0xff]
        %v373 = vld [vmem:[#allocation2 + $0x178] sm:$0xff]
        %v374 = vld [vmem:[#allocation2 + $0x180] sm:$0xff]
        %v375 = vld [vmem:[#allocation2 + $0x188] sm:$0xff]
        %v376 = vld [vmem:[#allocation2 + $0x190] sm:$0xff]
        %v377 = vld [vmem:[#allocation2 + $0x198] sm:$0xff]
        %v378 = vld [vmem:[#allocation2 + $0x1a0] sm:$0xff]
        %v379 = vld [vmem:[#allocation2 + $0x1a8] sm:$0xff]
        %v380 = vld [vmem:[#allocation2 + $0x1b0] sm:$0xff]
        %v381 = vld [vmem:[#allocation2 + $0x1b8] sm:$0xff]
        %v382 = vld [vmem:[#allocation2 + $0x1c0] sm:$0xff]
        %v383 = vld [vmem:[#allocation2 + $0x1c8] sm:$0xff]
        %v384 = vld [vmem:[#allocation2 + $0x1d0] sm:$0xff]
        %v385 = vld [vmem:[#allocation2 + $0x1d8] sm:$0xff]
        %v386 = vld [vmem:[#allocation2 + $0x1e0] sm:$0xff]
        %v387 = vld [vmem:[#allocation2 + $0x1e8] sm:$0xff]
        %v388 = vld [vmem:[#allocation2 + $0x1f0] sm:$0xff]
        %v389 = vld [vmem:[#allocation2 + $0x1f8] sm:$0xff]
        %v390 = vld [vmem:[#allocation2 + $0x200] sm:$0xff]
        %v391 = vld [vmem:[#allocation2 + $0x208] sm:$0xff]
        %v392 = vld [vmem:[#allocation2 + $0x210] sm:$0xff]
        %v393 = vld [vmem:[#allocation2 + $0x218] sm:$0xff]
        %v394 = vld [vmem:[#allocation2 + $0x220] sm:$0xff]
        %v395 = vld [vmem:[#allocation2 + $0x228] sm:$0xff]
        %v396 = vld [vmem:[#allocation2 + $0x230] sm:$0xff]
        %v397 = vld [vmem:[#allocation2 + $0x238] sm:$0xff]
        %v398 = vld [vmem:[#allocation2 + $0x240] sm:$0xff]
        %v399 = vld [vmem:[#allocation2 + $0x248] sm:$0xff]
        %v400 = vld [vmem:[#allocation2 + $0x250] sm:$0xff]
        %v401 = vld [vmem:[#allocation2 + $0x258] sm:$0xff]
        %v402 = vld [vmem:[#allocation2 + $0x260] sm:$0xff]
        %v403 = vld [vmem:[#allocation2 + $0x268] sm:$0xff]
        %v404 = vld [vmem:[#allocation2 + $0x270] sm:$0xff]
        %v405 = vld [vmem:[#allocation2 + $0x278] sm:$0xff]
        %v406 = vld [vmem:[#allocation2 + $0x280] sm:$0xff]
        %v407 = vld [vmem:[#allocation2 + $0x288] sm:$0xff]
        %v408 = vld [vmem:[#allocation2 + $0x290] sm:$0xff]
        %v409 = vld [vmem:[#allocation2 + $0x298] sm:$0xff]
        %v410 = vld [vmem:[#allocation2 + $0x2a0] sm:$0xff]
        %v411 = vld [vmem:[#allocation2 + $0x2a8] sm:$0xff]
        %v412 = vld [vmem:[#allocation2 + $0x2b0] sm:$0xff]
        %v413 = vld [vmem:[#allocation2 + $0x2b8] sm:$0xff]
        %v414 = vld [vmem:[#allocation2 + $0x2c0] sm:$0xff]
        %v415 = vld [vmem:[#allocation2 + $0x2c8] sm:$0xff]
        %v416 = vld [vmem:[#allocation2 + $0x2d0] sm:$0xff]
        %v417 = vld [vmem:[#allocation2 + $0x2d8] sm:$0xff]
        %v418 = vld [vmem:[#allocation2 + $0x2e0] sm:$0xff]
        %v419 = vld [vmem:[#allocation2 + $0x2e8] sm:$0xff]
        %v420 = vld [vmem:[#allocation2 + $0x2f0] sm:$0xff]
        %v421 = vld [vmem:[#allocation2 + $0x2f8] sm:$0xff]
        %v422 = vld [vmem:[#allocation2 + $0x300] sm:$0xff]
        %v423 = vld [vmem:[#allocation2 + $0x308] sm:$0xff]
        %v424 = vld [vmem:[#allocation2 + $0x310] sm:$0xff]
        %v425 = vld [vmem:[#allocation2 + $0x318] sm:$0xff]
        %v426 = vld [vmem:[#allocation2 + $0x320] sm:$0xff]
        %v427 = vld [vmem:[#allocation2 + $0x328] sm:$0xff]
        %v428 = vld [vmem:[#allocation2 + $0x330] sm:$0xff]
        %v429 = vld [vmem:[#allocation2 + $0x338] sm:$0xff]
        %v430 = vld [vmem:[#allocation2 + $0x340] sm:$0xff]
        %v431 = vld [vmem:[#allocation2 + $0x348] sm:$0xff]
        %v432 = vld [vmem:[#allocation2 + $0x350] sm:$0xff]
        %v433 = vld [vmem:[#allocation2 + $0x358] sm:$0xff]
        %v434 = vld [vmem:[#allocation2 + $0x360] sm:$0xff]
        %v435 = vld [vmem:[#allocation2 + $0x368] sm:$0xff]
        %v436 = vld [vmem:[#allocation2 + $0x370] sm:$0xff]
        %v437 = vld [vmem:[#allocation2 + $0x378] sm:$0xff]
        %v438 = vld [vmem:[#allocation2 + $0x380] sm:$0xff]
        %v439 = vld [vmem:[#allocation2 + $0x388] sm:$0xff]
        %v440 = vld [vmem:[#allocation2 + $0x390] sm:$0xff]
        %v441 = vld [vmem:[#allocation2 + $0x398] sm:$0xff]
        %v442 = vld [vmem:[#allocation2 + $0x3a0] sm:$0xff]
        %v443 = vld [vmem:[#allocation2 + $0x3a8] sm:$0xff]
        %v444 = vld [vmem:[#allocation2 + $0x3b0] sm:$0xff]
        %v445 = vld [vmem:[#allocation2 + $0x3b8] sm:$0xff]
        %v446 = vld [vmem:[#allocation2 + $0x3c0] sm:$0xff]
        %v447 = vld [vmem:[#allocation2 + $0x3c8] sm:$0xff]
        %v448 = vld [vmem:[#allocation2 + $0x3d0] sm:$0xff]
        %v449 = vld [vmem:[#allocation2 + $0x3d8] sm:$0xff]
        %v450 = vld [vmem:[#allocation2 + $0x3e0] sm:$0xff]
        %v451 = vld [vmem:[#allocation2 + $0x3e8] sm:$0xff]
        %v452 = vld [vmem:[#allocation2 + $0x3f0] sm:$0xff]
        %v453 = vld [vmem:[#allocation2 + $0x3f8] sm:$0xff]
        %v454 = vld [vmem:[#allocation2 + $0x400] sm:$0xff]
        %v455 = vld [vmem:[#allocation2 + $0x408] sm:$0xff]
        %v456 = vld [vmem:[#allocation2 + $0x410] sm:$0xff]
        %v457 = vld [vmem:[#allocation2 + $0x418] sm:$0xff]
        %v458 = vld [vmem:[#allocation2 + $0x420] sm:$0xff]
        %v459 = vld [vmem:[#allocation2 + $0x428] sm:$0xff]
        %v460 = vld [vmem:[#allocation2 + $0x430] sm:$0xff]
        %v461 = vld [vmem:[#allocation2 + $0x438] sm:$0xff]
        %v462 = vld [vmem:[#allocation2 + $0x440] sm:$0xff]
        %v463 = vld [vmem:[#allocation2 + $0x448] sm:$0xff]
        %v464 = vld [vmem:[#allocation2 + $0x450] sm:$0xff]
        %v465 = vld [vmem:[#allocation2 + $0x458] sm:$0xff]
        %v466 = vld [vmem:[#allocation2 + $0x460] sm:$0xff]
        %v467 = vld [vmem:[#allocation2 + $0x468] sm:$0xff]
        %v468 = vld [vmem:[#allocation2 + $0x470] sm:$0xff]
        %v469 = vld [vmem:[#allocation2 + $0x478] sm:$0xff]
        %v470 = vld [vmem:[#allocation2 + $0x480] sm:$0xff]
        %v471 = vld [vmem:[#allocation2 + $0x488] sm:$0xff]
        %v472 = vld [vmem:[#allocation2 + $0x490] sm:$0xff]
        %v473 = vld [vmem:[#allocation2 + $0x498] sm:$0xff]
        %v474 = vld [vmem:[#allocation2 + $0x4a0] sm:$0xff]
        %v475 = vld [vmem:[#allocation2 + $0x4a8] sm:$0xff]
        %v476 = vld [vmem:[#allocation2 + $0x4b0] sm:$0xff]
        %v477 = vld [vmem:[#allocation2 + $0x4b8] sm:$0xff]
        %v478 = vld [vmem:[#allocation2 + $0x4c0] sm:$0xff]
        %v479 = vld [vmem:[#allocation2 + $0x4c8] sm:$0xff]
        %v480 = vld [vmem:[#allocation2 + $0x4d0] sm:$0xff]
        %v481 = vld [vmem:[#allocation2 + $0x4d8] sm:$0xff]
        %v482 = vld [vmem:[#allocation2 + $0x4e0] sm:$0xff]
        %v483 = vld [vmem:[#allocation2 + $0x4e8] sm:$0xff]
        %v484 = vld [vmem:[#allocation2 + $0x4f0] sm:$0xff]
        %v485 = vld [vmem:[#allocation2 + $0x4f8] sm:$0xff]
        %v486 = vld [vmem:[#allocation2 + $0x500] sm:$0xff]
        %v487 = vld [vmem:[#allocation2 + $0x508] sm:$0xff]
        %v488 = vld [vmem:[#allocation2 + $0x510] sm:$0xff]
        %v489 = vld [vmem:[#allocation2 + $0x518] sm:$0xff]
        %v490 = vld [vmem:[#allocation2 + $0x520] sm:$0xff]
        %v491 = vld [vmem:[#allocation2 + $0x528] sm:$0xff]
        %v492 = vld [vmem:[#allocation2 + $0x530] sm:$0xff]
        %v493 = vld [vmem:[#allocation2 + $0x538] sm:$0xff]
        %v494 = vld [vmem:[#allocation2 + $0x540] sm:$0xff]
        %v495 = vld [vmem:[#allocation2 + $0x548] sm:$0xff]
        %v496 = vld [vmem:[#allocation2 + $0x550] sm:$0xff]
        %v497 = vld [vmem:[#allocation2 + $0x558] sm:$0xff]
        %v498 = vld [vmem:[#allocation2 + $0x560] sm:$0xff]
        %v499 = vld [vmem:[#allocation2 + $0x568] sm:$0xff]
        %v500 = vld [vmem:[#allocation2 + $0x570] sm:$0xff]
        %v501 = vld [vmem:[#allocation2 + $0x578] sm:$0xff]
        %v502 = vld [vmem:[#allocation2 + $0x580] sm:$0xff]
        %v503 = vld [vmem:[#allocation2 + $0x588] sm:$0xff]
        %v504 = vld [vmem:[#allocation2 + $0x590] sm:$0xff]
        %v505 = vld [vmem:[#allocation2 + $0x598] sm:$0xff]
        %v506 = vld [vmem:[#allocation2 + $0x5a0] sm:$0xff]
        %v507 = vld [vmem:[#allocation2 + $0x5a8] sm:$0xff]
        %v508 = vld [vmem:[#allocation2 + $0x5b0] sm:$0xff]
        %v509 = vld [vmem:[#allocation2 + $0x5b8] sm:$0xff]
        %v510 = vld [vmem:[#allocation2 + $0x5c0] sm:$0xff]
        %v511 = vld [vmem:[#allocation2 + $0x5c8] sm:$0xff]
        %v512 = vld [vmem:[#allocation2 + $0x5d0] sm:$0xff]
        %v513 = vld [vmem:[#allocation2 + $0x5d8] sm:$0xff]
        %v514 = vld [vmem:[#allocation2 + $0x5e0] sm:$0xff]
        %v515 = vld [vmem:[#allocation2 + $0x5e8] sm:$0xff]
        %v516 = vld [vmem:[#allocation2 + $0x5f0] sm:$0xff]
        %v517 = vld [vmem:[#allocation2 + $0x5f8] sm:$0xff]
        %v518 = vld [vmem:[#allocation2 + $0x600] sm:$0xff]
        %v519 = vld [vmem:[#allocation2 + $0x608] sm:$0xff]
        %v520 = vld [vmem:[#allocation2 + $0x610] sm:$0xff]
        %v521 = vld [vmem:[#allocation2 + $0x618] sm:$0xff]
        %v522 = vld [vmem:[%s3] sm:$0xff]
        %v523 = vld [vmem:[%s3 + $0x8] sm:$0xff]
        %v524 = vld [vmem:[%s3 + $0x10] sm:$0x11]
        %v525 = vld [vmem:[%s3 + $0x18] sm:$0x11]
        %v530 = vunpack.c.l.b16 %v522
        %v531 = vunpack.c.h.b16 %v522
        %v532 = vunpack.c.l.b16 %v523
        %v533 = vunpack.c.h.b16 %v523
        %v534 = vunpack.c.l.b16 %v524
        %v535 = vunpack.c.h.b16 %v524
        %v536 = vunpack.c.l.b16 %v525
        %v537 = vunpack.c.h.b16 %v525
        %v538 = vpack.c.b16 %v534, %v530
        %v539 = vpack.c.b16 %v535, %v531
        %v540 = vpack.c.b16 %v536, %v532
        %v541 = vpack.c.b16 %v537, %v533
        %vm542 = vcmask 80896
        %v544 = vsel %vm542, %v325, 0
        %vm546 = vcmask 1044480
        %v548 = vsel %vm546, %v538, 0
        %v551 = vsel %vm546, %v539, 0
        %v554 = vsel %vm546, %v540, 0
        %v557 = vsel %vm546, %v541, 0
        %559 = vmatprep.subr.bf16.mxu0 %v551
        %560 = vmatpush1.bf16.msra.mxu0 %v548
        %561 = vmatprep.subr.bf16.mxu0 0
        %562 = vmatpush1.bf16.msra.mxu0 0
        %563 = vmatprep.subr.bf16.mxu0 0
        %564 = vmatpush1.bf16.msra.mxu0 0
        %565 = vmatprep.subr.bf16.mxu0 0
        %566 = vmatpush1.bf16.msra.mxu0 0
        %567 = vmatprep.subr.bf16.mxu0 0
        %568 = vmatpush1.bf16.msra.mxu0 0
        %569 = vmatprep.subr.bf16.mxu0 0
        %570 = vmatpush1.bf16.msra.mxu0 0
        %571 = vmatprep.subr.bf16.mxu0 0
        %572 = vmatpush1.bf16.msra.mxu0 0
        %573 = vmatprep.subr.bf16.mxu0 0
        %574 = vmatpush1.bf16.msra.mxu0 0
        %575 = vmatprep.subr.bf16.mxu0 0
        %576 = vmatpush1.bf16.msra.mxu0 0
        %577 = vmatprep.subr.bf16.mxu0 0
        %578 = vmatpush1.bf16.msra.mxu0 0
        %579 = vmatprep.subr.bf16.mxu0 0
        %580 = vmatpush1.bf16.msra.mxu0 0
        %581 = vmatprep.subr.bf16.mxu0 0
        %582 = vmatpush1.bf16.msra.mxu0 0
        %583 = vmatprep.subr.bf16.mxu0 0
        %584 = vmatpush1.bf16.msra.mxu0 0
        %585 = vmatprep.subr.bf16.mxu0 0
        %586 = vmatpush1.bf16.msra.mxu0 0
        %587 = vmatprep.subr.bf16.mxu0 0
        %588 = vmatpush1.bf16.msra.mxu0 0
        %589 = vmatprep.subr.bf16.mxu0 0
        %590 = vmatpush1.bf16.msra.mxu0 0
        %591 = vmatprep.mubr.bf16.mxu0 0
        %592 = vmatmul.mubr.bf16.gmra.mrb[0].mxu0 %v544
        %v593 = vpop.f32.mrb[0].mxu0
        %v594 = vadd.f32 0.0, %v593
        %v595 = vpop.f32.mrb[0].mxu0
        %v596 = vadd.f32 0.0, %v595
        %v597 = vpop.f32.mrb[0].mxu0
        %v598 = vpop.f32.mrb[0].mxu0
        %599 = vdwg.mxu0
        %600 = vmatprep.subr.bf16.mxu0 %v557
        %601 = vmatpush1.bf16.msra.mxu0 %v554
        %602 = vmatprep.subr.bf16.mxu0 0
        %603 = vmatpush1.bf16.msra.mxu0 0
        %604 = vmatprep.subr.bf16.mxu0 0
        %605 = vmatpush1.bf16.msra.mxu0 0
        %606 = vmatprep.subr.bf16.mxu0 0
        %607 = vmatpush1.bf16.msra.mxu0 0
        %608 = vmatprep.subr.bf16.mxu0 0
        %609 = vmatpush1.bf16.msra.mxu0 0
        %610 = vmatprep.subr.bf16.mxu0 0
        %611 = vmatpush1.bf16.msra.mxu0 0
        %612 = vmatprep.subr.bf16.mxu0 0
        %613 = vmatpush1.bf16.msra.mxu0 0
        %614 = vmatprep.subr.bf16.mxu0 0
        %615 = vmatpush1.bf16.msra.mxu0 0
        %616 = vmatprep.subr.bf16.mxu0 0
        %617 = vmatpush1.bf16.msra.mxu0 0
        %618 = vmatprep.subr.bf16.mxu0 0
        %619 = vmatpush1.bf16.msra.mxu0 0
        %620 = vmatprep.subr.bf16.mxu0 0
        %621 = vmatpush1.bf16.msra.mxu0 0
        %622 = vmatprep.subr.bf16.mxu0 0
        %623 = vmatpush1.bf16.msra.mxu0 0
        %624 = vmatprep.subr.bf16.mxu0 0
        %625 = vmatpush1.bf16.msra.mxu0 0
        %626 = vmatprep.subr.bf16.mxu0 0
        %627 = vmatpush1.bf16.msra.mxu0 0
        %628 = vmatprep.subr.bf16.mxu0 0
        %629 = vmatpush1.bf16.msra.mxu0 0
        %630 = vmatprep.subr.bf16.mxu0 0
        %631 = vmatpush1.bf16.msra.mxu0 0
        %632 = vmatprep.mubr.bf16.mxu0 0
        %633 = vmatmul.mubr.bf16.gmra.mrb[0].mxu0 %v544
        %v634 = vpop.f32.mrb[0].mxu0
        %v635 = vadd.f32 0.0, %v634
        %v636 = vpop.f32.mrb[0].mxu0
        %v637 = vadd.f32 0.0, %v636
        %v638 = vpop.f32.mrb[0].mxu0
        %v639 = vpop.f32.mrb[0].mxu0
        %640 = vdwg.mxu0
        %v837 = vunpack.c.l.b16 %v326
        %v838 = vunpack.c.h.b16 %v326
        %v839 = vunpack.c.l.b16 %v327
        %v840 = vunpack.c.h.b16 %v327
        %v841 = vunpack.c.l.b16 %v328
        %v842 = vunpack.c.h.b16 %v328
        %v843 = vunpack.c.l.b16 %v329
        %v844 = vunpack.c.h.b16 %v329
        %v845 = vunpack.c.l.b16 %v330
        %v846 = vunpack.c.h.b16 %v330
        %v847 = vunpack.c.l.b16 %v331
        %v848 = vunpack.c.h.b16 %v331
        %v849 = vunpack.c.l.b16 %v332
        %v850 = vunpack.c.h.b16 %v332
        %v851 = vunpack.c.l.b16 %v333
        %v852 = vunpack.c.h.b16 %v333
        %v853 = vunpack.c.l.b16 %v334
        %v854 = vunpack.c.h.b16 %v334
        %v855 = vunpack.c.l.b16 %v335
        %v856 = vunpack.c.h.b16 %v335
        %v857 = vunpack.c.l.b16 %v336
        %v858 = vunpack.c.h.b16 %v336
        %v859 = vunpack.c.l.b16 %v337
        %v860 = vunpack.c.h.b16 %v337
        %v861 = vunpack.c.l.b16 %v338
        %v862 = vunpack.c.h.b16 %v338
        %v863 = vunpack.c.l.b16 %v339
        %v864 = vunpack.c.h.b16 %v339
        %v865 = vunpack.c.l.b16 %v340
        %v866 = vunpack.c.h.b16 %v340
        %v867 = vunpack.c.l.b16 %v341
        %v868 = vunpack.c.h.b16 %v341
        %v869 = vunpack.c.l.b16 %v342
        %v870 = vunpack.c.h.b16 %v342
        %v871 = vunpack.c.l.b16 %v343
        %v872 = vunpack.c.h.b16 %v343
        %v873 = vunpack.c.l.b16 %v344
        %v874 = vunpack.c.h.b16 %v344
        %v875 = vunpack.c.l.b16 %v345
        %v876 = vunpack.c.h.b16 %v345
        %v877 = vunpack.c.l.b16 %v346
        %v878 = vunpack.c.h.b16 %v346
        %v879 = vunpack.c.l.b16 %v347
        %v880 = vunpack.c.h.b16 %v347
        %v881 = vunpack.c.l.b16 %v348
        %v882 = vunpack.c.h.b16 %v348
        %v883 = vunpack.c.l.b16 %v349
        %v884 = vunpack.c.h.b16 %v349
        %v885 = vunpack.c.l.b16 %v350
        %v886 = vunpack.c.h.b16 %v350
        %v887 = vunpack.c.l.b16 %v351
        %v888 = vunpack.c.h.b16 %v351
        %v889 = vunpack.c.l.b16 %v352
        %v890 = vunpack.c.h.b16 %v352
        %v891 = vunpack.c.l.b16 %v353
        %v892 = vunpack.c.h.b16 %v353
        %v893 = vunpack.c.l.b16 %v354
        %v894 = vunpack.c.h.b16 %v354
        %v895 = vunpack.c.l.b16 %v355
        %v896 = vunpack.c.h.b16 %v355
        %v897 = vunpack.c.l.b16 %v356
        %v898 = vunpack.c.h.b16 %v356
        %v899 = vunpack.c.l.b16 %v357
        %v900 = vunpack.c.h.b16 %v357
        %v901 = vunpack.c.l.b16 %v358
        %v902 = vunpack.c.h.b16 %v358
        %v903 = vunpack.c.l.b16 %v359
        %v904 = vunpack.c.h.b16 %v359
        %v905 = vunpack.c.l.b16 %v360
        %v906 = vunpack.c.h.b16 %v360
        %v907 = vunpack.c.l.b16 %v361
        %v908 = vunpack.c.h.b16 %v361
        %v909 = vunpack.c.l.b16 %v362
        %v910 = vunpack.c.h.b16 %v362
        %v911 = vunpack.c.l.b16 %v363
        %v912 = vunpack.c.h.b16 %v363
        %v913 = vunpack.c.l.b16 %v364
        %v914 = vunpack.c.h.b16 %v364
        %v915 = vunpack.c.l.b16 %v365
        %v916 = vunpack.c.h.b16 %v365
        %v917 = vunpack.c.l.b16 %v366
        %v918 = vunpack.c.h.b16 %v366
        %v919 = vunpack.c.l.b16 %v367
        %v920 = vunpack.c.h.b16 %v367
        %v921 = vunpack.c.l.b16 %v368
        %v922 = vunpack.c.h.b16 %v368
        %v923 = vunpack.c.l.b16 %v369
        %v924 = vunpack.c.h.b16 %v369
        %v925 = vunpack.c.l.b16 %v370
        %v926 = vunpack.c.h.b16 %v370
        %v927 = vunpack.c.l.b16 %v371
        %v928 = vunpack.c.h.b16 %v371
        %v929 = vunpack.c.l.b16 %v372
        %v930 = vunpack.c.h.b16 %v372
        %v931 = vunpack.c.l.b16 %v373
        %v932 = vunpack.c.h.b16 %v373
        %v933 = vunpack.c.l.b16 %v374
        %v934 = vunpack.c.h.b16 %v374
        %v935 = vunpack.c.l.b16 %v375
        %v936 = vunpack.c.h.b16 %v375
        %v937 = vunpack.c.l.b16 %v376
        %v938 = vunpack.c.h.b16 %v376
        %v939 = vunpack.c.l.b16 %v377
        %v940 = vunpack.c.h.b16 %v377
        %v941 = vunpack.c.l.b16 %v378
        %v942 = vunpack.c.h.b16 %v378
        %v943 = vunpack.c.l.b16 %v379
        %v944 = vunpack.c.h.b16 %v379
        %v945 = vunpack.c.l.b16 %v380
        %v946 = vunpack.c.h.b16 %v380
        %v947 = vunpack.c.l.b16 %v381
        %v948 = vunpack.c.h.b16 %v381
        %v949 = vunpack.c.l.b16 %v382
        %v950 = vunpack.c.h.b16 %v382
        %v951 = vunpack.c.l.b16 %v383
        %v952 = vunpack.c.h.b16 %v383
        %v953 = vunpack.c.l.b16 %v384
        %v954 = vunpack.c.h.b16 %v384
        %v955 = vunpack.c.l.b16 %v385
        %v956 = vunpack.c.h.b16 %v385
        %v957 = vunpack.c.l.b16 %v386
        %v958 = vunpack.c.h.b16 %v386
        %v959 = vunpack.c.l.b16 %v387
        %v960 = vunpack.c.h.b16 %v387
        %v961 = vunpack.c.l.b16 %v388
        %v962 = vunpack.c.h.b16 %v388
        %v963 = vunpack.c.l.b16 %v389
        %v964 = vunpack.c.h.b16 %v389
        %v965 = vunpack.c.l.b16 %v390
        %v966 = vunpack.c.h.b16 %v390
        %v967 = vunpack.c.l.b16 %v391
        %v968 = vunpack.c.h.b16 %v391
        %v969 = vunpack.c.l.b16 %v392
        %v970 = vunpack.c.h.b16 %v392
        %v971 = vunpack.c.l.b16 %v393
        %v972 = vunpack.c.h.b16 %v393
        %v973 = vunpack.c.l.b16 %v394
        %v974 = vunpack.c.h.b16 %v394
        %v975 = vunpack.c.l.b16 %v395
        %v976 = vunpack.c.h.b16 %v395
        %v977 = vunpack.c.l.b16 %v396
        %v978 = vunpack.c.h.b16 %v396
        %v979 = vunpack.c.l.b16 %v397
        %v980 = vunpack.c.h.b16 %v397
        %v981 = vunpack.c.l.b16 %v398
        %v982 = vunpack.c.h.b16 %v398
        %v983 = vunpack.c.l.b16 %v399
        %v984 = vunpack.c.h.b16 %v399
        %v985 = vunpack.c.l.b16 %v400
        %v986 = vunpack.c.h.b16 %v400
        %v987 = vunpack.c.l.b16 %v401
        %v988 = vunpack.c.h.b16 %v401
        %v989 = vunpack.c.l.b16 %v402
        %v990 = vunpack.c.h.b16 %v402
        %v991 = vunpack.c.l.b16 %v403
        %v992 = vunpack.c.h.b16 %v403
        %v993 = vunpack.c.l.b16 %v404
        %v994 = vunpack.c.h.b16 %v404
        %v995 = vunpack.c.l.b16 %v405
        %v996 = vunpack.c.h.b16 %v405
        %v997 = vunpack.c.l.b16 %v406
        %v998 = vunpack.c.h.b16 %v406
        %v999 = vunpack.c.l.b16 %v407
        %v1000 = vunpack.c.h.b16 %v407
        %v1001 = vunpack.c.l.b16 %v408
        %v1002 = vunpack.c.h.b16 %v408
        %v1003 = vunpack.c.l.b16 %v409
        %v1004 = vunpack.c.h.b16 %v409
        %v1005 = vunpack.c.l.b16 %v410
        %v1006 = vunpack.c.h.b16 %v410
        %v1007 = vunpack.c.l.b16 %v411
        %v1008 = vunpack.c.h.b16 %v411
        %v1009 = vunpack.c.l.b16 %v412
        %v1010 = vunpack.c.h.b16 %v412
        %v1011 = vunpack.c.l.b16 %v413
        %v1012 = vunpack.c.h.b16 %v413
        %v1013 = vunpack.c.l.b16 %v414
        %v1014 = vunpack.c.h.b16 %v414
        %v1015 = vunpack.c.l.b16 %v415
        %v1016 = vunpack.c.h.b16 %v415
        %v1017 = vunpack.c.l.b16 %v416
        %v1018 = vunpack.c.h.b16 %v416
        %v1019 = vunpack.c.l.b16 %v417
        %v1020 = vunpack.c.h.b16 %v417
        %v1021 = vunpack.c.l.b16 %v418
        %v1022 = vunpack.c.h.b16 %v418
        %v1023 = vunpack.c.l.b16 %v419
        %v1024 = vunpack.c.h.b16 %v419
        %v1025 = vunpack.c.l.b16 %v420
        %v1026 = vunpack.c.h.b16 %v420
        %v1027 = vunpack.c.l.b16 %v421
        %v1028 = vunpack.c.h.b16 %v421
        %v1029 = vunpack.c.l.b16 %v422
        %v1030 = vunpack.c.h.b16 %v422
        %v1031 = vunpack.c.l.b16 %v423
        %v1032 = vunpack.c.h.b16 %v423
        %v1033 = vunpack.c.l.b16 %v424
        %v1034 = vunpack.c.h.b16 %v424
        %v1035 = vunpack.c.l.b16 %v425
        %v1036 = vunpack.c.h.b16 %v425
        %v1037 = vunpack.c.l.b16 %v426
        %v1038 = vunpack.c.h.b16 %v426
        %v1039 = vunpack.c.l.b16 %v427
        %v1040 = vunpack.c.h.b16 %v427
        %v1041 = vunpack.c.l.b16 %v428
        %v1042 = vunpack.c.h.b16 %v428
        %v1043 = vunpack.c.l.b16 %v429
        %v1044 = vunpack.c.h.b16 %v429
        %v1045 = vunpack.c.l.b16 %v430
        %v1046 = vunpack.c.h.b16 %v430
        %v1047 = vunpack.c.l.b16 %v431
        %v1048 = vunpack.c.h.b16 %v431
        %v1049 = vunpack.c.l.b16 %v432
        %v1050 = vunpack.c.h.b16 %v432
        %v1051 = vunpack.c.l.b16 %v433
        %v1052 = vunpack.c.h.b16 %v433
        %v1053 = vunpack.c.l.b16 %v434
        %v1054 = vunpack.c.h.b16 %v434
        %v1055 = vunpack.c.l.b16 %v435
        %v1056 = vunpack.c.h.b16 %v435
        %v1057 = vunpack.c.l.b16 %v436
        %v1058 = vunpack.c.h.b16 %v436
        %v1059 = vunpack.c.l.b16 %v437
        %v1060 = vunpack.c.h.b16 %v437
        %v1061 = vunpack.c.l.b16 %v438
        %v1062 = vunpack.c.h.b16 %v438
        %v1063 = vunpack.c.l.b16 %v439
        %v1064 = vunpack.c.h.b16 %v439
        %v1065 = vunpack.c.l.b16 %v440
        %v1066 = vunpack.c.h.b16 %v440
        %v1067 = vunpack.c.l.b16 %v441
        %v1068 = vunpack.c.h.b16 %v441
        %v1069 = vunpack.c.l.b16 %v442
        %v1070 = vunpack.c.h.b16 %v442
        %v1071 = vunpack.c.l.b16 %v443
        %v1072 = vunpack.c.h.b16 %v443
        %v1073 = vunpack.c.l.b16 %v444
        %v1074 = vunpack.c.h.b16 %v444
        %v1075 = vunpack.c.l.b16 %v445
        %v1076 = vunpack.c.h.b16 %v445
        %v1077 = vunpack.c.l.b16 %v446
        %v1078 = vunpack.c.h.b16 %v446
        %v1079 = vunpack.c.l.b16 %v447
        %v1080 = vunpack.c.h.b16 %v447
        %v1081 = vunpack.c.l.b16 %v448
        %v1082 = vunpack.c.h.b16 %v448
        %v1083 = vunpack.c.l.b16 %v449
        %v1084 = vunpack.c.h.b16 %v449
        %v1085 = vunpack.c.l.b16 %v450
        %v1086 = vunpack.c.h.b16 %v450
        %v1087 = vunpack.c.l.b16 %v451
        %v1088 = vunpack.c.h.b16 %v451
        %v1089 = vunpack.c.l.b16 %v452
        %v1090 = vunpack.c.h.b16 %v452
        %v1091 = vunpack.c.l.b16 %v453
        %v1092 = vunpack.c.h.b16 %v453
        %v1093 = vunpack.c.l.b16 %v454
        %v1094 = vunpack.c.h.b16 %v454
        %v1095 = vunpack.c.l.b16 %v455
        %v1096 = vunpack.c.h.b16 %v455
        %v1097 = vunpack.c.l.b16 %v456
        %v1098 = vunpack.c.h.b16 %v456
        %v1099 = vunpack.c.l.b16 %v457
        %v1100 = vunpack.c.h.b16 %v457
        %v1101 = vunpack.c.l.b16 %v458
        %v1102 = vunpack.c.h.b16 %v458
        %v1103 = vunpack.c.l.b16 %v459
        %v1104 = vunpack.c.h.b16 %v459
        %v1105 = vunpack.c.l.b16 %v460
        %v1106 = vunpack.c.h.b16 %v460
        %v1107 = vunpack.c.l.b16 %v461
        %v1108 = vunpack.c.h.b16 %v461
        %v1109 = vunpack.c.l.b16 %v462
        %v1110 = vunpack.c.h.b16 %v462
        %v1111 = vunpack.c.l.b16 %v463
        %v1112 = vunpack.c.h.b16 %v463
        %v1113 = vunpack.c.l.b16 %v464
        %v1114 = vunpack.c.h.b16 %v464
        %v1115 = vunpack.c.l.b16 %v465
        %v1116 = vunpack.c.h.b16 %v465
        %v1117 = vunpack.c.l.b16 %v466
        %v1118 = vunpack.c.h.b16 %v466
        %v1119 = vunpack.c.l.b16 %v467
        %v1120 = vunpack.c.h.b16 %v467
        %v1121 = vunpack.c.l.b16 %v468
        %v1122 = vunpack.c.h.b16 %v468
        %v1123 = vunpack.c.l.b16 %v469
        %v1124 = vunpack.c.h.b16 %v469
        %v1125 = vunpack.c.l.b16 %v470
        %v1126 = vunpack.c.h.b16 %v470
        %v1127 = vunpack.c.l.b16 %v471
        %v1128 = vunpack.c.h.b16 %v471
        %v1129 = vunpack.c.l.b16 %v472
        %v1130 = vunpack.c.h.b16 %v472
        %v1131 = vunpack.c.l.b16 %v473
        %v1132 = vunpack.c.h.b16 %v473
        %v1133 = vunpack.c.l.b16 %v474
        %v1134 = vunpack.c.h.b16 %v474
        %v1135 = vunpack.c.l.b16 %v475
        %v1136 = vunpack.c.h.b16 %v475
        %v1137 = vunpack.c.l.b16 %v476
        %v1138 = vunpack.c.h.b16 %v476
        %v1139 = vunpack.c.l.b16 %v477
        %v1140 = vunpack.c.h.b16 %v477
        %v1141 = vunpack.c.l.b16 %v478
        %v1142 = vunpack.c.h.b16 %v478
        %v1143 = vunpack.c.l.b16 %v479
        %v1144 = vunpack.c.h.b16 %v479
        %v1145 = vunpack.c.l.b16 %v480
        %v1146 = vunpack.c.h.b16 %v480
        %v1147 = vunpack.c.l.b16 %v481
        %v1148 = vunpack.c.h.b16 %v481
        %v1149 = vunpack.c.l.b16 %v482
        %v1150 = vunpack.c.h.b16 %v482
        %v1151 = vunpack.c.l.b16 %v483
        %v1152 = vunpack.c.h.b16 %v483
        %v1153 = vunpack.c.l.b16 %v484
        %v1154 = vunpack.c.h.b16 %v484
        %v1155 = vunpack.c.l.b16 %v485
        %v1156 = vunpack.c.h.b16 %v485
        %v1157 = vunpack.c.l.b16 %v486
        %v1158 = vunpack.c.h.b16 %v486
        %v1159 = vunpack.c.l.b16 %v487
        %v1160 = vunpack.c.h.b16 %v487
        %v1161 = vunpack.c.l.b16 %v488
        %v1162 = vunpack.c.h.b16 %v488
        %v1163 = vunpack.c.l.b16 %v489
        %v1164 = vunpack.c.h.b16 %v489
        %v1165 = vunpack.c.l.b16 %v490
        %v1166 = vunpack.c.h.b16 %v490
        %v1167 = vunpack.c.l.b16 %v491
        %v1168 = vunpack.c.h.b16 %v491
        %v1169 = vunpack.c.l.b16 %v492
        %v1170 = vunpack.c.h.b16 %v492
        %v1171 = vunpack.c.l.b16 %v493
        %v1172 = vunpack.c.h.b16 %v493
        %v1173 = vunpack.c.l.b16 %v494
        %v1174 = vunpack.c.h.b16 %v494
        %v1175 = vunpack.c.l.b16 %v495
        %v1176 = vunpack.c.h.b16 %v495
        %v1177 = vunpack.c.l.b16 %v496
        %v1178 = vunpack.c.h.b16 %v496
        %v1179 = vunpack.c.l.b16 %v497
        %v1180 = vunpack.c.h.b16 %v497
        %v1181 = vunpack.c.l.b16 %v498
        %v1182 = vunpack.c.h.b16 %v498
        %v1183 = vunpack.c.l.b16 %v499
        %v1184 = vunpack.c.h.b16 %v499
        %v1185 = vunpack.c.l.b16 %v500
        %v1186 = vunpack.c.h.b16 %v500
        %v1187 = vunpack.c.l.b16 %v501
        %v1188 = vunpack.c.h.b16 %v501
        %v1189 = vunpack.c.l.b16 %v502
        %v1190 = vunpack.c.h.b16 %v502
        %v1191 = vunpack.c.l.b16 %v503
        %v1192 = vunpack.c.h.b16 %v503
        %v1193 = vunpack.c.l.b16 %v504
        %v1194 = vunpack.c.h.b16 %v504
        %v1195 = vunpack.c.l.b16 %v505
        %v1196 = vunpack.c.h.b16 %v505
        %v1197 = vunpack.c.l.b16 %v506
        %v1198 = vunpack.c.h.b16 %v506
        %v1199 = vunpack.c.l.b16 %v507
        %v1200 = vunpack.c.h.b16 %v507
        %v1201 = vunpack.c.l.b16 %v508
        %v1202 = vunpack.c.h.b16 %v508
        %v1203 = vunpack.c.l.b16 %v509
        %v1204 = vunpack.c.h.b16 %v509
        %v1205 = vunpack.c.l.b16 %v510
        %v1206 = vunpack.c.h.b16 %v510
        %v1207 = vunpack.c.l.b16 %v511
        %v1208 = vunpack.c.h.b16 %v511
        %v1209 = vunpack.c.l.b16 %v512
        %v1210 = vunpack.c.h.b16 %v512
        %v1211 = vunpack.c.l.b16 %v513
        %v1212 = vunpack.c.h.b16 %v513
        %v1213 = vunpack.c.l.b16 %v514
        %v1214 = vunpack.c.h.b16 %v514
        %v1215 = vunpack.c.l.b16 %v515
        %v1216 = vunpack.c.h.b16 %v515
        %v1217 = vunpack.c.l.b16 %v516
        %v1218 = vunpack.c.h.b16 %v516
        %v1219 = vunpack.c.l.b16 %v517
        %v1220 = vunpack.c.h.b16 %v517
        %v1221 = vunpack.c.l.b16 %v518
        %v1222 = vunpack.c.h.b16 %v518
        %v1223 = vunpack.c.l.b16 %v519
        %v1224 = vunpack.c.h.b16 %v519
        %v1225 = vunpack.c.l.b16 %v520
        %v1226 = vunpack.c.h.b16 %v520
        %v1227 = vunpack.c.l.b16 %v521
        %v1228 = vunpack.c.h.b16 %v521
        %v1229 = vpack.c.b16 %v841, %v837
        %v1230 = vpack.c.b16 %v842, %v838
        %v1231 = vpack.c.b16 %v843, %v839
        %v1232 = vpack.c.b16 %v844, %v840
        %v1233 = vpack.c.b16 %v849, %v845
        %v1234 = vpack.c.b16 %v850, %v846
        %v1235 = vpack.c.b16 %v851, %v847
        %v1236 = vpack.c.b16 %v852, %v848
        %v1237 = vpack.c.b16 %v857, %v853
        %v1238 = vpack.c.b16 %v858, %v854
        %v1239 = vpack.c.b16 %v859, %v855
        %v1240 = vpack.c.b16 %v860, %v856
        %v1241 = vpack.c.b16 %v865, %v861
        %v1242 = vpack.c.b16 %v866, %v862
        %v1243 = vpack.c.b16 %v867, %v863
        %v1244 = vpack.c.b16 %v868, %v864
        %v1245 = vpack.c.b16 %v873, %v869
        %v1246 = vpack.c.b16 %v874, %v870
        %v1247 = vpack.c.b16 %v875, %v871
        %v1248 = vpack.c.b16 %v876, %v872
        %v1249 = vpack.c.b16 %v881, %v877
        %v1250 = vpack.c.b16 %v882, %v878
        %v1251 = vpack.c.b16 %v883, %v879
        %v1252 = vpack.c.b16 %v884, %v880
        %v1253 = vpack.c.b16 %v889, %v885
        %v1254 = vpack.c.b16 %v890, %v886
        %v1255 = vpack.c.b16 %v891, %v887
        %v1256 = vpack.c.b16 %v892, %v888
        %v1257 = vpack.c.b16 %v897, %v893
        %v1258 = vpack.c.b16 %v898, %v894
        %v1259 = vpack.c.b16 %v899, %v895
        %v1260 = vpack.c.b16 %v900, %v896
        %v1261 = vpack.c.b16 %v905, %v901
        %v1262 = vpack.c.b16 %v906, %v902
        %v1263 = vpack.c.b16 %v907, %v903
        %v1264 = vpack.c.b16 %v908, %v904
        %v1265 = vpack.c.b16 %v913, %v909
        %v1266 = vpack.c.b16 %v914, %v910
        %v1267 = vpack.c.b16 %v915, %v911
        %v1268 = vpack.c.b16 %v916, %v912
        %v1269 = vpack.c.b16 %v921, %v917
        %v1270 = vpack.c.b16 %v922, %v918
        %v1271 = vpack.c.b16 %v923, %v919
        %v1272 = vpack.c.b16 %v924, %v920
        %v1273 = vpack.c.b16 %v929, %v925
        %v1274 = vpack.c.b16 %v930, %v926
        %v1275 = vpack.c.b16 %v931, %v927
        %v1276 = vpack.c.b16 %v932, %v928
        %v1277 = vpack.c.b16 %v937, %v933
        %v1278 = vpack.c.b16 %v938, %v934
        %v1279 = vpack.c.b16 %v939, %v935
        %v1280 = vpack.c.b16 %v940, %v936
        %v1281 = vpack.c.b16 %v945, %v941
        %v1282 = vpack.c.b16 %v946, %v942
        %v1283 = vpack.c.b16 %v947, %v943
        %v1284 = vpack.c.b16 %v948, %v944
        %v1285 = vpack.c.b16 %v953, %v949
        %v1286 = vpack.c.b16 %v954, %v950
        %v1287 = vpack.c.b16 %v955, %v951
        %v1288 = vpack.c.b16 %v956, %v952
        %v1289 = vpack.c.b16 %v961, %v957
        %v1290 = vpack.c.b16 %v962, %v958
        %v1291 = vpack.c.b16 %v963, %v959
        %v1292 = vpack.c.b16 %v964, %v960
        %v1293 = vpack.c.b16 %v969, %v965
        %v1294 = vpack.c.b16 %v970, %v966
        %v1295 = vpack.c.b16 %v971, %v967
        %v1296 = vpack.c.b16 %v972, %v968
        %v1297 = vpack.c.b16 %v977, %v973
        %v1298 = vpack.c.b16 %v978, %v974
        %v1299 = vpack.c.b16 %v979, %v975
        %v1300 = vpack.c.b16 %v980, %v976
        %v1301 = vpack.c.b16 %v985, %v981
        %v1302 = vpack.c.b16 %v986, %v982
        %v1303 = vpack.c.b16 %v987, %v983
        %v1304 = vpack.c.b16 %v988, %v984
        %v1305 = vpack.c.b16 %v993, %v989
        %v1306 = vpack.c.b16 %v994, %v990
        %v1307 = vpack.c.b16 %v995, %v991
        %v1308 = vpack.c.b16 %v996, %v992
        %v1309 = vpack.c.b16 %v1001, %v997
        %v1310 = vpack.c.b16 %v1002, %v998
        %v1311 = vpack.c.b16 %v1003, %v999
        %v1312 = vpack.c.b16 %v1004, %v1000
        %v1313 = vpack.c.b16 %v1009, %v1005
        %v1314 = vpack.c.b16 %v1010, %v1006
        %v1315 = vpack.c.b16 %v1011, %v1007
        %v1316 = vpack.c.b16 %v1012, %v1008
        %v1317 = vpack.c.b16 %v1017, %v1013
        %v1318 = vpack.c.b16 %v1018, %v1014
        %v1319 = vpack.c.b16 %v1019, %v1015
        %v1320 = vpack.c.b16 %v1020, %v1016
        %v1321 = vpack.c.b16 %v1025, %v1021
        %v1322 = vpack.c.b16 %v1026, %v1022
        %v1323 = vpack.c.b16 %v1027, %v1023
        %v1324 = vpack.c.b16 %v1028, %v1024
        %v1325 = vpack.c.b16 %v1033, %v1029
        %v1326 = vpack.c.b16 %v1034, %v1030
        %v1327 = vpack.c.b16 %v1035, %v1031
        %v1328 = vpack.c.b16 %v1036, %v1032
        %v1329 = vpack.c.b16 %v1041, %v1037
        %v1330 = vpack.c.b16 %v1042, %v1038
        %v1331 = vpack.c.b16 %v1043, %v1039
        %v1332 = vpack.c.b16 %v1044, %v1040
        %v1333 = vpack.c.b16 %v1049, %v1045
        %v1334 = vpack.c.b16 %v1050, %v1046
        %v1335 = vpack.c.b16 %v1051, %v1047
        %v1336 = vpack.c.b16 %v1052, %v1048
        %v1337 = vpack.c.b16 %v1057, %v1053
        %v1338 = vpack.c.b16 %v1058, %v1054
        %v1339 = vpack.c.b16 %v1059, %v1055
        %v1340 = vpack.c.b16 %v1060, %v1056
        %v1341 = vpack.c.b16 %v1065, %v1061
        %v1342 = vpack.c.b16 %v1066, %v1062
        %v1343 = vpack.c.b16 %v1067, %v1063
        %v1344 = vpack.c.b16 %v1068, %v1064
        %v1345 = vpack.c.b16 %v1073, %v1069
        %v1346 = vpack.c.b16 %v1074, %v1070
        %v1347 = vpack.c.b16 %v1075, %v1071
        %v1348 = vpack.c.b16 %v1076, %v1072
        %v1349 = vpack.c.b16 %v1081, %v1077
        %v1350 = vpack.c.b16 %v1082, %v1078
        %v1351 = vpack.c.b16 %v1083, %v1079
        %v1352 = vpack.c.b16 %v1084, %v1080
        %v1353 = vpack.c.b16 %v1089, %v1085
        %v1354 = vpack.c.b16 %v1090, %v1086
        %v1355 = vpack.c.b16 %v1091, %v1087
        %v1356 = vpack.c.b16 %v1092, %v1088
        %v1357 = vpack.c.b16 %v1097, %v1093
        %v1358 = vpack.c.b16 %v1098, %v1094
        %v1359 = vpack.c.b16 %v1099, %v1095
        %v1360 = vpack.c.b16 %v1100, %v1096
        %v1361 = vpack.c.b16 %v1105, %v1101
        %v1362 = vpack.c.b16 %v1106, %v1102
        %v1363 = vpack.c.b16 %v1107, %v1103
        %v1364 = vpack.c.b16 %v1108, %v1104
        %v1365 = vpack.c.b16 %v1113, %v1109
        %v1366 = vpack.c.b16 %v1114, %v1110
        %v1367 = vpack.c.b16 %v1115, %v1111
        %v1368 = vpack.c.b16 %v1116, %v1112
        %v1369 = vpack.c.b16 %v1121, %v1117
        %v1370 = vpack.c.b16 %v1122, %v1118
        %v1371 = vpack.c.b16 %v1123, %v1119
        %v1372 = vpack.c.b16 %v1124, %v1120
        %v1373 = vpack.c.b16 %v1129, %v1125
        %v1374 = vpack.c.b16 %v1130, %v1126
        %v1375 = vpack.c.b16 %v1131, %v1127
        %v1376 = vpack.c.b16 %v1132, %v1128
        %v1377 = vpack.c.b16 %v1137, %v1133
        %v1378 = vpack.c.b16 %v1138, %v1134
        %v1379 = vpack.c.b16 %v1139, %v1135
        %v1380 = vpack.c.b16 %v1140, %v1136
        %v1381 = vpack.c.b16 %v1145, %v1141
        %v1382 = vpack.c.b16 %v1146, %v1142
        %v1383 = vpack.c.b16 %v1147, %v1143
        %v1384 = vpack.c.b16 %v1148, %v1144
        %v1385 = vpack.c.b16 %v1153, %v1149
        %v1386 = vpack.c.b16 %v1154, %v1150
        %v1387 = vpack.c.b16 %v1155, %v1151
        %v1388 = vpack.c.b16 %v1156, %v1152
        %v1389 = vpack.c.b16 %v1161, %v1157
        %v1390 = vpack.c.b16 %v1162, %v1158
        %v1391 = vpack.c.b16 %v1163, %v1159
        %v1392 = vpack.c.b16 %v1164, %v1160
        %v1393 = vpack.c.b16 %v1169, %v1165
        %v1394 = vpack.c.b16 %v1170, %v1166
        %v1395 = vpack.c.b16 %v1171, %v1167
        %v1396 = vpack.c.b16 %v1172, %v1168
        %v1397 = vpack.c.b16 %v1177, %v1173
        %v1398 = vpack.c.b16 %v1178, %v1174
        %v1399 = vpack.c.b16 %v1179, %v1175
        %v1400 = vpack.c.b16 %v1180, %v1176
        %v1401 = vpack.c.b16 %v1185, %v1181
        %v1402 = vpack.c.b16 %v1186, %v1182
        %v1403 = vpack.c.b16 %v1187, %v1183
        %v1404 = vpack.c.b16 %v1188, %v1184
        %v1405 = vpack.c.b16 %v1193, %v1189
        %v1406 = vpack.c.b16 %v1194, %v1190
        %v1407 = vpack.c.b16 %v1195, %v1191
        %v1408 = vpack.c.b16 %v1196, %v1192
        %v1409 = vpack.c.b16 %v1201, %v1197
        %v1410 = vpack.c.b16 %v1202, %v1198
        %v1411 = vpack.c.b16 %v1203, %v1199
        %v1412 = vpack.c.b16 %v1204, %v1200
        %v1413 = vpack.c.b16 %v1209, %v1205
        %v1414 = vpack.c.b16 %v1210, %v1206
        %v1415 = vpack.c.b16 %v1211, %v1207
        %v1416 = vpack.c.b16 %v1212, %v1208
        %v1417 = vpack.c.b16 %v1217, %v1213
        %v1418 = vpack.c.b16 %v1218, %v1214
        %v1419 = vpack.c.b16 %v1219, %v1215
        %v1420 = vpack.c.b16 %v1220, %v1216
        %v1421 = vpack.c.b16 %v1225, %v1221
        %v1422 = vpack.c.b16 %v1226, %v1222
        %v1423 = vpack.c.b16 %v1227, %v1223
        %v1424 = vpack.c.b16 %v1228, %v1224
        %vm1621 = vcmask 130048
        %v1623 = vsel %vm1621, %v323, 0
        %1625 = vmatprep.subr.bf16.mxu0 %v1230
        %1626 = vmatpush1.bf16.msra.mxu0 %v1229
        %1627 = vmatprep.subr.bf16.mxu0 %v1234
        %1628 = vmatpush1.bf16.msra.mxu0 %v1233
        %1629 = vmatprep.subr.bf16.mxu0 %v1238
        %1630 = vmatpush1.bf16.msra.mxu0 %v1237
        %1631 = vmatprep.subr.bf16.mxu0 %v1242
        %1632 = vmatpush1.bf16.msra.mxu0 %v1241
        %1633 = vmatprep.subr.bf16.mxu0 %v1246
        %1634 = vmatpush1.bf16.msra.mxu0 %v1245
        %1635 = vmatprep.subr.bf16.mxu0 %v1250
        %1636 = vmatpush1.bf16.msra.mxu0 %v1249
        %1637 = vmatprep.subr.bf16.mxu0 %v1254
        %1638 = vmatpush1.bf16.msra.mxu0 %v1253
        %1639 = vmatprep.subr.bf16.mxu0 %v1258
        %1640 = vmatpush1.bf16.msra.mxu0 %v1257
        %1641 = vmatprep.subr.bf16.mxu0 %v1262
        %1642 = vmatpush1.bf16.msra.mxu0 %v1261
        %1643 = vmatprep.subr.bf16.mxu0 %v1266
        %1644 = vmatpush1.bf16.msra.mxu0 %v1265
        %1645 = vmatprep.subr.bf16.mxu0 %v1270
        %1646 = vmatpush1.bf16.msra.mxu0 %v1269
        %1647 = vmatprep.subr.bf16.mxu0 %v1274
        %1648 = vmatpush1.bf16.msra.mxu0 %v1273
        %1649 = vmatprep.subr.bf16.mxu0 %v1278
        %1650 = vmatpush1.bf16.msra.mxu0 %v1277
        %1651 = vmatprep.subr.bf16.mxu0 %v1282
        %1652 = vmatpush1.bf16.msra.mxu0 %v1281
        %1653 = vmatprep.subr.bf16.mxu0 %v1286
        %1654 = vmatpush1.bf16.msra.mxu0 %v1285
        %1655 = vmatprep.subr.bf16.mxu0 %v1290
        %1656 = vmatpush1.bf16.msra.mxu0 %v1289
        %1657 = vmatprep.mubr.bf16.mxu0 %v318
        %1658 = vmatmul.mubr.bf16.gmra.mrb[0].mxu0 %v317
        %v1659 = vpop.f32.mrb[0].mxu0
        %v1660 = vadd.f32 %v594, %v1659
        %v1661 = vpop.f32.mrb[0].mxu0
        %v1662 = vadd.f32 %v596, %v1661
        %v1663 = vpop.f32.mrb[0].mxu0
        %v1664 = vpop.f32.mrb[0].mxu0
        %1665 = vdwg.mxu0
        %1666 = vmatprep.subr.bf16.mxu0 %v1294
        %1667 = vmatpush1.bf16.msra.mxu0 %v1293
        %1668 = vmatprep.subr.bf16.mxu0 %v1298
        %1669 = vmatpush1.bf16.msra.mxu0 %v1297
        %1670 = vmatprep.subr.bf16.mxu0 %v1302
        %1671 = vmatpush1.bf16.msra.mxu0 %v1301
        %1672 = vmatprep.subr.bf16.mxu0 %v1306
        %1673 = vmatpush1.bf16.msra.mxu0 %v1305
        %1674 = vmatprep.subr.bf16.mxu0 %v1310
        %1675 = vmatpush1.bf16.msra.mxu0 %v1309
        %1676 = vmatprep.subr.bf16.mxu0 %v1314
        %1677 = vmatpush1.bf16.msra.mxu0 %v1313
        %1678 = vmatprep.subr.bf16.mxu0 %v1318
        %1679 = vmatpush1.bf16.msra.mxu0 %v1317
        %1680 = vmatprep.subr.bf16.mxu0 %v1322
        %1681 = vmatpush1.bf16.msra.mxu0 %v1321
        %1682 = vmatprep.subr.bf16.mxu0 %v1326
        %1683 = vmatpush1.bf16.msra.mxu0 %v1325
        %1684 = vmatprep.subr.bf16.mxu0 %v1330
        %1685 = vmatpush1.bf16.msra.mxu0 %v1329
        %1686 = vmatprep.subr.bf16.mxu0 %v1334
        %1687 = vmatpush1.bf16.msra.mxu0 %v1333
        %1688 = vmatprep.subr.bf16.mxu0 %v1338
        %1689 = vmatpush1.bf16.msra.mxu0 %v1337
        %1690 = vmatprep.subr.bf16.mxu0 %v1342
        %1691 = vmatpush1.bf16.msra.mxu0 %v1341
        %1692 = vmatprep.subr.bf16.mxu0 %v1346
        %1693 = vmatpush1.bf16.msra.mxu0 %v1345
        %1694 = vmatprep.subr.bf16.mxu0 %v1350
        %1695 = vmatpush1.bf16.msra.mxu0 %v1349
        %1696 = vmatprep.subr.bf16.mxu0 %v1354
        %1697 = vmatpush1.bf16.msra.mxu0 %v1353
        %1698 = vmatprep.mubr.bf16.mxu0 %v320
        %1699 = vmatmul.mubr.bf16.gmra.mrb[0].mxu0 %v319
        %v1700 = vpop.f32.mrb[0].mxu0
        %v1701 = vadd.f32 %v1660, %v1700
        %v1702 = vpop.f32.mrb[0].mxu0
        %v1703 = vadd.f32 %v1662, %v1702
        %v1704 = vpop.f32.mrb[0].mxu0
        %v1705 = vpop.f32.mrb[0].mxu0
        %1706 = vdwg.mxu0
        %1707 = vmatprep.subr.bf16.mxu0 %v1358
        %1708 = vmatpush1.bf16.msra.mxu0 %v1357
        %1709 = vmatprep.subr.bf16.mxu0 %v1362
        %1710 = vmatpush1.bf16.msra.mxu0 %v1361
        %1711 = vmatprep.subr.bf16.mxu0 %v1366
        %1712 = vmatpush1.bf16.msra.mxu0 %v1365
        %1713 = vmatprep.subr.bf16.mxu0 %v1370
        %1714 = vmatpush1.bf16.msra.mxu0 %v1369
        %1715 = vmatprep.subr.bf16.mxu0 %v1374
        %1716 = vmatpush1.bf16.msra.mxu0 %v1373
        %1717 = vmatprep.subr.bf16.mxu0 %v1378
        %1718 = vmatpush1.bf16.msra.mxu0 %v1377
        %1719 = vmatprep.subr.bf16.mxu0 %v1382
        %1720 = vmatpush1.bf16.msra.mxu0 %v1381
        %1721 = vmatprep.subr.bf16.mxu0 %v1386
        %1722 = vmatpush1.bf16.msra.mxu0 %v1385
        %1723 = vmatprep.subr.bf16.mxu0 %v1390
        %1724 = vmatpush1.bf16.msra.mxu0 %v1389
        %1725 = vmatprep.subr.bf16.mxu0 %v1394
        %1726 = vmatpush1.bf16.msra.mxu0 %v1393
        %1727 = vmatprep.subr.bf16.mxu0 %v1398
        %1728 = vmatpush1.bf16.msra.mxu0 %v1397
        %1729 = vmatprep.subr.bf16.mxu0 %v1402
        %1730 = vmatpush1.bf16.msra.mxu0 %v1401
        %1731 = vmatprep.subr.bf16.mxu0 %v1406
        %1732 = vmatpush1.bf16.msra.mxu0 %v1405
        %1733 = vmatprep.subr.bf16.mxu0 %v1410
        %1734 = vmatpush1.bf16.msra.mxu0 %v1409
        %1735 = vmatprep.subr.bf16.mxu0 %v1414
        %1736 = vmatpush1.bf16.msra.mxu0 %v1413
        %1737 = vmatprep.subr.bf16.mxu0 %v1418
        %1738 = vmatpush1.bf16.msra.mxu0 %v1417
        %1739 = vmatprep.mubr.bf16.mxu0 %v322
        %1740 = vmatmul.mubr.bf16.gmra.mrb[0].mxu0 %v321
        %v1741 = vpop.f32.mrb[0].mxu0
        %v1742 = vadd.f32 %v1701, %v1741
        %v1743 = vpop.f32.mrb[0].mxu0
        %v1744 = vadd.f32 %v1703, %v1743
        %v1745 = vpop.f32.mrb[0].mxu0
        %v1746 = vpop.f32.mrb[0].mxu0
        %1747 = vdwg.mxu0
        %1748 = vmatprep.subr.bf16.mxu0 %v1422
        %1749 = vmatpush1.bf16.msra.mxu0 %v1421
        %1750 = vmatprep.subr.bf16.mxu0 0
        %1751 = vmatpush1.bf16.msra.mxu0 0
        %1752 = vmatprep.subr.bf16.mxu0 0
        %1753 = vmatpush1.bf16.msra.mxu0 0
        %1754 = vmatprep.subr.bf16.mxu0 0
        %1755 = vmatpush1.bf16.msra.mxu0 0
        %1756 = vmatprep.subr.bf16.mxu0 0
        %1757 = vmatpush1.bf16.msra.mxu0 0
        %1758 = vmatprep.subr.bf16.mxu0 0
        %1759 = vmatpush1.bf16.msra.mxu0 0
        %1760 = vmatprep.subr.bf16.mxu0 0
        %1761 = vmatpush1.bf16.msra.mxu0 0
        %1762 = vmatprep.subr.bf16.mxu0 0
        %1763 = vmatpush1.bf16.msra.mxu0 0
        %1764 = vmatprep.subr.bf16.mxu0 0
        %1765 = vmatpush1.bf16.msra.mxu0 0
        %1766 = vmatprep.subr.bf16.mxu0 0
        %1767 = vmatpush1.bf16.msra.mxu0 0
        %1768 = vmatprep.subr.bf16.mxu0 0
        %1769 = vmatpush1.bf16.msra.mxu0 0
        %1770 = vmatprep.subr.bf16.mxu0 0
        %1771 = vmatpush1.bf16.msra.mxu0 0
        %1772 = vmatprep.subr.bf16.mxu0 0
        %1773 = vmatpush1.bf16.msra.mxu0 0
        %1774 = vmatprep.subr.bf16.mxu0 0
        %1775 = vmatpush1.bf16.msra.mxu0 0
        %1776 = vmatprep.subr.bf16.mxu0 0
        %1777 = vmatpush1.bf16.msra.mxu0 0
        %1778 = vmatprep.subr.bf16.mxu0 0
        %1779 = vmatpush1.bf16.msra.mxu0 0
        %1780 = vmatprep.mubr.bf16.mxu0 0
        %1781 = vmatmul.mubr.bf16.gmra.mrb[0].mxu0 %v1623
        %v1782 = vpop.f32.mrb[0].mxu0
        %v1783 = vadd.f32 %v1742, %v1782
        %v1784 = vpop.f32.mrb[0].mxu0
        %v1785 = vadd.f32 %v1744, %v1784
        %v1786 = vpop.f32.mrb[0].mxu0
        %v1787 = vpop.f32.mrb[0].mxu0
        %1788 = vdwg.mxu0
        %1789 = vmatprep.subr.bf16.mxu0 %v1232
        %1790 = vmatpush1.bf16.msra.mxu0 %v1231
        %1791 = vmatprep.subr.bf16.mxu0 %v1236
        %1792 = vmatpush1.bf16.msra.mxu0 %v1235
        %1793 = vmatprep.subr.bf16.mxu0 %v1240
        %1794 = vmatpush1.bf16.msra.mxu0 %v1239
        %1795 = vmatprep.subr.bf16.mxu0 %v1244
        %1796 = vmatpush1.bf16.msra.mxu0 %v1243
        %1797 = vmatprep.subr.bf16.mxu0 %v1248
        %1798 = vmatpush1.bf16.msra.mxu0 %v1247
        %1799 = vmatprep.subr.bf16.mxu0 %v1252
        %1800 = vmatpush1.bf16.msra.mxu0 %v1251
        %1801 = vmatprep.subr.bf16.mxu0 %v1256
        %1802 = vmatpush1.bf16.msra.mxu0 %v1255
        %1803 = vmatprep.subr.bf16.mxu0 %v1260
        %1804 = vmatpush1.bf16.msra.mxu0 %v1259
        %1805 = vmatprep.subr.bf16.mxu0 %v1264
        %1806 = vmatpush1.bf16.msra.mxu0 %v1263
        %1807 = vmatprep.subr.bf16.mxu0 %v1268
        %1808 = vmatpush1.bf16.msra.mxu0 %v1267
        %1809 = vmatprep.subr.bf16.mxu0 %v1272
        %1810 = vmatpush1.bf16.msra.mxu0 %v1271
        %1811 = vmatprep.subr.bf16.mxu0 %v1276
        %1812 = vmatpush1.bf16.msra.mxu0 %v1275
        %1813 = vmatprep.subr.bf16.mxu0 %v1280
        %1814 = vmatpush1.bf16.msra.mxu0 %v1279
        %1815 = vmatprep.subr.bf16.mxu0 %v1284
        %1816 = vmatpush1.bf16.msra.mxu0 %v1283
        %1817 = vmatprep.subr.bf16.mxu0 %v1288
        %1818 = vmatpush1.bf16.msra.mxu0 %v1287
        %1819 = vmatprep.subr.bf16.mxu0 %v1292
        %1820 = vmatpush1.bf16.msra.mxu0 %v1291
        %1821 = vmatprep.mubr.bf16.mxu0 %v318
        %1822 = vmatmul.mubr.bf16.gmra.mrb[0].mxu0 %v317
        %v1823 = vpop.f32.mrb[0].mxu0
        %v1824 = vadd.f32 %v635, %v1823
        %v1825 = vpop.f32.mrb[0].mxu0
        %v1826 = vadd.f32 %v637, %v1825
        %v1827 = vpop.f32.mrb[0].mxu0
        %v1828 = vpop.f32.mrb[0].mxu0
        %1829 = vdwg.mxu0
        %1830 = vmatprep.subr.bf16.mxu0 %v1296
        %1831 = vmatpush1.bf16.msra.mxu0 %v1295
        %1832 = vmatprep.subr.bf16.mxu0 %v1300
        %1833 = vmatpush1.bf16.msra.mxu0 %v1299
        %1834 = vmatprep.subr.bf16.mxu0 %v1304
        %1835 = vmatpush1.bf16.msra.mxu0 %v1303
        %1836 = vmatprep.subr.bf16.mxu0 %v1308
        %1837 = vmatpush1.bf16.msra.mxu0 %v1307
        %1838 = vmatprep.subr.bf16.mxu0 %v1312
        %1839 = vmatpush1.bf16.msra.mxu0 %v1311
        %1840 = vmatprep.subr.bf16.mxu0 %v1316
        %1841 = vmatpush1.bf16.msra.mxu0 %v1315
        %1842 = vmatprep.subr.bf16.mxu0 %v1320
        %1843 = vmatpush1.bf16.msra.mxu0 %v1319
        %1844 = vmatprep.subr.bf16.mxu0 %v1324
        %1845 = vmatpush1.bf16.msra.mxu0 %v1323
        %1846 = vmatprep.subr.bf16.mxu0 %v1328
        %1847 = vmatpush1.bf16.msra.mxu0 %v1327
        %1848 = vmatprep.subr.bf16.mxu0 %v1332
        %1849 = vmatpush1.bf16.msra.mxu0 %v1331
        %1850 = vmatprep.subr.bf16.mxu0 %v1336
        %1851 = vmatpush1.bf16.msra.mxu0 %v1335
        %1852 = vmatprep.subr.bf16.mxu0 %v1340
        %1853 = vmatpush1.bf16.msra.mxu0 %v1339
        %1854 = vmatprep.subr.bf16.mxu0 %v1344
        %1855 = vmatpush1.bf16.msra.mxu0 %v1343
        %1856 = vmatprep.subr.bf16.mxu0 %v1348
        %1857 = vmatpush1.bf16.msra.mxu0 %v1347
        %1858 = vmatprep.subr.bf16.mxu0 %v1352
        %1859 = vmatpush1.bf16.msra.mxu0 %v1351
        %1860 = vmatprep.subr.bf16.mxu0 %v1356
        %1861 = vmatpush1.bf16.msra.mxu0 %v1355
        %1862 = vmatprep.mubr.bf16.mxu0 %v320
        %1863 = vmatmul.mubr.bf16.gmra.mrb[0].mxu0 %v319
        %v1864 = vpop.f32.mrb[0].mxu0
        %v1865 = vadd.f32 %v1824, %v1864
        %v1866 = vpop.f32.mrb[0].mxu0
        %v1867 = vadd.f32 %v1826, %v1866
        %v1868 = vpop.f32.mrb[0].mxu0
        %v1869 = vpop.f32.mrb[0].mxu0
        %1870 = vdwg.mxu0
        %1871 = vmatprep.subr.bf16.mxu0 %v1360
        %1872 = vmatpush1.bf16.msra.mxu0 %v1359
        %1873 = vmatprep.subr.bf16.mxu0 %v1364
        %1874 = vmatpush1.bf16.msra.mxu0 %v1363
        %1875 = vmatprep.subr.bf16.mxu0 %v1368
        %1876 = vmatpush1.bf16.msra.mxu0 %v1367
        %1877 = vmatprep.subr.bf16.mxu0 %v1372
        %1878 = vmatpush1.bf16.msra.mxu0 %v1371
        %1879 = vmatprep.subr.bf16.mxu0 %v1376
        %1880 = vmatpush1.bf16.msra.mxu0 %v1375
        %1881 = vmatprep.subr.bf16.mxu0 %v1380
        %1882 = vmatpush1.bf16.msra.mxu0 %v1379
        %1883 = vmatprep.subr.bf16.mxu0 %v1384
        %1884 = vmatpush1.bf16.msra.mxu0 %v1383
        %1885 = vmatprep.subr.bf16.mxu0 %v1388
        %1886 = vmatpush1.bf16.msra.mxu0 %v1387
        %1887 = vmatprep.subr.bf16.mxu0 %v1392
        %1888 = vmatpush1.bf16.msra.mxu0 %v1391
        %1889 = vmatprep.subr.bf16.mxu0 %v1396
        %1890 = vmatpush1.bf16.msra.mxu0 %v1395
        %1891 = vmatprep.subr.bf16.mxu0 %v1400
        %1892 = vmatpush1.bf16.msra.mxu0 %v1399
        %1893 = vmatprep.subr.bf16.mxu0 %v1404
        %1894 = vmatpush1.bf16.msra.mxu0 %v1403
        %1895 = vmatprep.subr.bf16.mxu0 %v1408
        %1896 = vmatpush1.bf16.msra.mxu0 %v1407
        %1897 = vmatprep.subr.bf16.mxu0 %v1412
        %1898 = vmatpush1.bf16.msra.mxu0 %v1411
        %1899 = vmatprep.subr.bf16.mxu0 %v1416
        %1900 = vmatpush1.bf16.msra.mxu0 %v1415
        %1901 = vmatprep.subr.bf16.mxu0 %v1420
        %1902 = vmatpush1.bf16.msra.mxu0 %v1419
        %1903 = vmatprep.mubr.bf16.mxu0 %v322
        %1904 = vmatmul.mubr.bf16.gmra.mrb[0].mxu0 %v321
        %v1905 = vpop.f32.mrb[0].mxu0
        %v1906 = vadd.f32 %v1865, %v1905
        %v1907 = vpop.f32.mrb[0].mxu0
        %v1908 = vadd.f32 %v1867, %v1907
        %v1909 = vpop.f32.mrb[0].mxu0
        %v1910 = vpop.f32.mrb[0].mxu0
        %1911 = vdwg.mxu0
        %1912 = vmatprep.subr.bf16.mxu0 %v1424
        %1913 = vmatpush1.bf16.msra.mxu0 %v1423
        %1914 = vmatprep.subr.bf16.mxu0 0
        %1915 = vmatpush1.bf16.msra.mxu0 0
        %1916 = vmatprep.subr.bf16.mxu0 0
        %1917 = vmatpush1.bf16.msra.mxu0 0
        %1918 = vmatprep.subr.bf16.mxu0 0
        %1919 = vmatpush1.bf16.msra.mxu0 0
        %1920 = vmatprep.subr.bf16.mxu0 0
        %1921 = vmatpush1.bf16.msra.mxu0 0
        %1922 = vmatprep.subr.bf16.mxu0 0
        %1923 = vmatpush1.bf16.msra.mxu0 0
        %1924 = vmatprep.subr.bf16.mxu0 0
        %1925 = vmatpush1.bf16.msra.mxu0 0
        %1926 = vmatprep.subr.bf16.mxu0 0
        %1927 = vmatpush1.bf16.msra.mxu0 0
        %1928 = vmatprep.subr.bf16.mxu0 0
        %1929 = vmatpush1.bf16.msra.mxu0 0
        %1930 = vmatprep.subr.bf16.mxu0 0
        %1931 = vmatpush1.bf16.msra.mxu0 0
        %1932 = vmatprep.subr.bf16.mxu0 0
        %1933 = vmatpush1.bf16.msra.mxu0 0
        %1934 = vmatprep.subr.bf16.mxu0 0
        %1935 = vmatpush1.bf16.msra.mxu0 0
        %1936 = vmatprep.subr.bf16.mxu0 0
        %1937 = vmatpush1.bf16.msra.mxu0 0
        %1938 = vmatprep.subr.bf16.mxu0 0
        %1939 = vmatpush1.bf16.msra.mxu0 0
        %1940 = vmatprep.subr.bf16.mxu0 0
        %1941 = vmatpush1.bf16.msra.mxu0 0
        %1942 = vmatprep.subr.bf16.mxu0 0
        %1943 = vmatpush1.bf16.msra.mxu0 0
        %1944 = vmatprep.mubr.bf16.mxu0 0
        %1945 = vmatmul.mubr.bf16.gmra.mrb[0].mxu0 %v1623
        %v1946 = vpop.f32.mrb[0].mxu0
        %v1947 = vadd.f32 %v1906, %v1946
        %v1948 = vpop.f32.mrb[0].mxu0
        %v1949 = vadd.f32 %v1908, %v1948
        %v1950 = vpop.f32.mrb[0].mxu0
        %v1951 = vpop.f32.mrb[0].mxu0
        %1952 = vdwg.mxu0
        %v1953 = vld [vmem:[%s4] sm:$0xf]
        %v1955 = vlaneseq
        %v1956 = vshrl.u32 %v1955, 7
        %v1957 = vsub.s32 0, %v1956
        %v1958 = vrot.slane %v1953, %v1957
        %v1959 = vlaneseq
        %v1960 = vshrl.u32 %v1959, 7
        %v1961 = vsub.s32 1, %v1960
        %v1962 = vrot.slane %v1953, %v1961
        %v1963 = vlaneseq
        %v1964 = vshrl.u32 %v1963, 7
        %v1965 = vsub.s32 2, %v1964
        %v1966 = vrot.slane %v1953, %v1965
        %v1967 = vlaneseq
        %v1968 = vshrl.u32 %v1967, 7
        %v1969 = vsub.s32 3, %v1968
        %v1970 = vrot.slane %v1953, %v1969
        %v1975 = vadd.f32 %v1783, %v1958
        %v1976 = vadd.f32 %v1785, %v1962
        %v1977 = vadd.f32 %v1947, %v1966
        %v1978 = vadd.f32 %v1949, %v1970
        %v1979 = vmax.f32 %v1975, 0.0
        %v1980 = vmax.f32 %v1976, 0.0
        %v1981 = vmax.f32 %v1977, 0.0
        %v1982 = vmax.f32 %v1978, 0.0
        %v1983 = vpack.c.bf16 %v1979, %v1979
        %v1984 = vpack.c.bf16 %v1980, %v1980
        %v1985 = vpack.c.bf16 %v1981, %v1981
        %v1986 = vpack.c.bf16 %v1982, %v1982
        %v1987 = vld [vmem:[%s5] sm:$0xf]
        %v1988 = vld [vmem:[%s5 + $0x4] sm:$0xf]
        %v1989 = vld [vmem:[%s5 + $0x8] sm:$0xf]
        %v1990 = vld [vmem:[%s5 + $0xc] sm:$0xf]
        %v1991 = vld [vmem:[%s5 + $0x10] sm:$0xf]
        %v1992 = vld [vmem:[%s5 + $0x14] sm:$0xf]
        %v1993 = vld [vmem:[%s5 + $0x18] sm:$0xf]
        %v1994 = vld [vmem:[%s5 + $0x1c] sm:$0xf]
        %v1995 = vld [vmem:[%s5 + $0x20] sm:$0xf]
        %v1996 = vld [vmem:[%s5 + $0x24] sm:$0xf]
        %v1997 = vld [vmem:[%s5 + $0x28] sm:$0xf]
        %v1998 = vld [vmem:[%s5 + $0x2c] sm:$0xf]
        %v1999 = vld [vmem:[%s5 + $0x30] sm:$0xf]
        %v2000 = vld [vmem:[%s5 + $0x34] sm:$0xf]
        %v2001 = vld [vmem:[%s5 + $0x38] sm:$0xf]
        %v2002 = vld [vmem:[%s5 + $0x3c] sm:$0xf]
        %v2003 = vld [vmem:[%s5 + $0x40] sm:$0xf]
        %v2004 = vld [vmem:[%s5 + $0x44] sm:$0xf]
        %v2005 = vld [vmem:[%s5 + $0x48] sm:$0xf]
        %v2006 = vld [vmem:[%s5 + $0x4c] sm:$0xf]
        %v2007 = vld [vmem:[%s5 + $0x50] sm:$0xf]
        %v2008 = vld [vmem:[%s5 + $0x54] sm:$0xf]
        %v2009 = vld [vmem:[%s5 + $0x58] sm:$0xf]
        %v2010 = vld [vmem:[%s5 + $0x5c] sm:$0xf]
        %v2011 = vld [vmem:[%s5 + $0x60] sm:$0xf]
        %v2012 = vld [vmem:[%s5 + $0x64] sm:$0xf]
        %v2013 = vld [vmem:[%s5 + $0x68] sm:$0xf]
        %v2014 = vld [vmem:[%s5 + $0x6c] sm:$0xf]
        %v2015 = vld [vmem:[%s5 + $0x70] sm:$0xf]
        %v2016 = vld [vmem:[%s5 + $0x74] sm:$0xf]
        %v2017 = vld [vmem:[%s5 + $0x78] sm:$0xf]
        %v2018 = vld [vmem:[%s5 + $0x7c] sm:$0xf]
        %v2019 = vld [vmem:[%s5 + $0x80] sm:$0xf]
        %v2020 = vld [vmem:[%s5 + $0x84] sm:$0xf]
        %v2021 = vld [vmem:[%s5 + $0x88] sm:$0xf]
        %v2022 = vld [vmem:[%s5 + $0x8c] sm:$0xf]
        %v2023 = vld [vmem:[%s5 + $0x90] sm:$0xf]
        %v2024 = vld [vmem:[%s5 + $0x94] sm:$0xf]
        %v2025 = vld [vmem:[%s5 + $0x98] sm:$0xf]
        %v2026 = vld [vmem:[%s5 + $0x9c] sm:$0xf]
        %v2027 = vld [vmem:[%s5 + $0xa0] sm:$0xf]
        %v2028 = vld [vmem:[%s5 + $0xa4] sm:$0xf]
        %v2029 = vld [vmem:[%s5 + $0xa8] sm:$0xf]
        %v2030 = vld [vmem:[%s5 + $0xac] sm:$0xf]
        %v2031 = vld [vmem:[%s5 + $0xb0] sm:$0xf]
        %v2032 = vld [vmem:[%s5 + $0xb4] sm:$0xf]
        %v2033 = vld [vmem:[%s5 + $0xb8] sm:$0xf]
        %v2034 = vld [vmem:[%s5 + $0xbc] sm:$0xf]
        %v2035 = vld [vmem:[%s5 + $0xc0] sm:$0xf]
        %v2036 = vld [vmem:[%s5 + $0xc4] sm:$0xf]
        %v2037 = vld [vmem:[%s5 + $0xc8] sm:$0xf]
        %v2038 = vld [vmem:[%s5 + $0xcc] sm:$0xf]
        %v2039 = vld [vmem:[%s5 + $0xd0] sm:$0xf]
        %v2040 = vld [vmem:[%s5 + $0xd4] sm:$0xf]
        %v2041 = vld [vmem:[%s5 + $0xd8] sm:$0xf]
        %v2042 = vld [vmem:[%s5 + $0xdc] sm:$0xf]
        %v2043 = vld [vmem:[%s5 + $0xe0] sm:$0xf]
        %v2044 = vld [vmem:[%s5 + $0xe4] sm:$0xf]
        %v2045 = vld [vmem:[%s5 + $0xe8] sm:$0xf]
        %v2046 = vld [vmem:[%s5 + $0xec] sm:$0xf]
        %v2047 = vld [vmem:[%s5 + $0xf0] sm:$0xf]
        %v2048 = vld [vmem:[%s5 + $0xf4] sm:$0xf]
        %v2049 = vld [vmem:[%s5 + $0xf8] sm:$0xf]
        %v2050 = vld [vmem:[%s5 + $0xfc] sm:$0xf]
        %v2051 = vld [vmem:[%s6] sm:$0x1]
        %v2053 = vlaneseq
        %v2054 = vshrl.u32 %v2053, 7
        %v2055 = vsub.s32 0, %v2054
        %v2056 = vrot.slane %v2051, %v2055
        %v2122 = vunpack.c.l.b16 %v1987
        %v2123 = vunpack.c.l.b16 %v1988
        %v2124 = vunpack.c.l.b16 %v1989
        %v2125 = vunpack.c.l.b16 %v1990
        %v2126 = vunpack.c.l.b16 %v1991
        %v2127 = vunpack.c.l.b16 %v1992
        %v2128 = vunpack.c.l.b16 %v1993
        %v2129 = vunpack.c.l.b16 %v1994
        %v2130 = vunpack.c.l.b16 %v1995
        %v2131 = vunpack.c.l.b16 %v1996
        %v2132 = vunpack.c.l.b16 %v1997
        %v2133 = vunpack.c.l.b16 %v1998
        %v2134 = vunpack.c.l.b16 %v1999
        %v2135 = vunpack.c.l.b16 %v2000
        %v2136 = vunpack.c.l.b16 %v2001
        %v2137 = vunpack.c.l.b16 %v2002
        %v2138 = vunpack.c.l.b16 %v2003
        %v2139 = vunpack.c.l.b16 %v2004
        %v2140 = vunpack.c.l.b16 %v2005
        %v2141 = vunpack.c.l.b16 %v2006
        %v2142 = vunpack.c.l.b16 %v2007
        %v2143 = vunpack.c.l.b16 %v2008
        %v2144 = vunpack.c.l.b16 %v2009
        %v2145 = vunpack.c.l.b16 %v2010
        %v2146 = vunpack.c.l.b16 %v2011
        %v2147 = vunpack.c.l.b16 %v2012
        %v2148 = vunpack.c.l.b16 %v2013
        %v2149 = vunpack.c.l.b16 %v2014
        %v2150 = vunpack.c.l.b16 %v2015
        %v2151 = vunpack.c.l.b16 %v2016
        %v2152 = vunpack.c.l.b16 %v2017
        %v2153 = vunpack.c.l.b16 %v2018
        %v2154 = vunpack.c.l.b16 %v2019
        %v2155 = vunpack.c.l.b16 %v2020
        %v2156 = vunpack.c.l.b16 %v2021
        %v2157 = vunpack.c.l.b16 %v2022
        %v2158 = vunpack.c.l.b16 %v2023
        %v2159 = vunpack.c.l.b16 %v2024
        %v2160 = vunpack.c.l.b16 %v2025
        %v2161 = vunpack.c.l.b16 %v2026
        %v2162 = vunpack.c.l.b16 %v2027
        %v2163 = vunpack.c.l.b16 %v2028
        %v2164 = vunpack.c.l.b16 %v2029
        %v2165 = vunpack.c.l.b16 %v2030
        %v2166 = vunpack.c.l.b16 %v2031
        %v2167 = vunpack.c.l.b16 %v2032
        %v2168 = vunpack.c.l.b16 %v2033
        %v2169 = vunpack.c.l.b16 %v2034
        %v2170 = vunpack.c.l.b16 %v2035
        %v2171 = vunpack.c.l.b16 %v2036
        %v2172 = vunpack.c.l.b16 %v2037
        %v2173 = vunpack.c.l.b16 %v2038
        %v2174 = vunpack.c.l.b16 %v2039
        %v2175 = vunpack.c.l.b16 %v2040
        %v2176 = vunpack.c.l.b16 %v2041
        %v2177 = vunpack.c.l.b16 %v2042
        %v2178 = vunpack.c.l.b16 %v2043
        %v2179 = vunpack.c.l.b16 %v2044
        %v2180 = vunpack.c.l.b16 %v2045
        %v2181 = vunpack.c.l.b16 %v2046
        %v2182 = vunpack.c.l.b16 %v2047
        %v2183 = vunpack.c.l.b16 %v2048
        %v2184 = vunpack.c.l.b16 %v2049
        %v2185 = vunpack.c.l.b16 %v2050
        %v2186 = vpack.c.b16 %v2123, %v2122
        %v2187 = vpack.c.b16 %v2125, %v2124
        %v2188 = vpack.c.b16 %v2127, %v2126
        %v2189 = vpack.c.b16 %v2129, %v2128
        %v2190 = vpack.c.b16 %v2131, %v2130
        %v2191 = vpack.c.b16 %v2133, %v2132
        %v2192 = vpack.c.b16 %v2135, %v2134
        %v2193 = vpack.c.b16 %v2137, %v2136
        %v2194 = vpack.c.b16 %v2139, %v2138
        %v2195 = vpack.c.b16 %v2141, %v2140
        %v2196 = vpack.c.b16 %v2143, %v2142
        %v2197 = vpack.c.b16 %v2145, %v2144
        %v2198 = vpack.c.b16 %v2147, %v2146
        %v2199 = vpack.c.b16 %v2149, %v2148
        %v2200 = vpack.c.b16 %v2151, %v2150
        %v2201 = vpack.c.b16 %v2153, %v2152
        %v2202 = vpack.c.b16 %v2155, %v2154
        %v2203 = vpack.c.b16 %v2157, %v2156
        %v2204 = vpack.c.b16 %v2159, %v2158
        %v2205 = vpack.c.b16 %v2161, %v2160
        %v2206 = vpack.c.b16 %v2163, %v2162
        %v2207 = vpack.c.b16 %v2165, %v2164
        %v2208 = vpack.c.b16 %v2167, %v2166
        %v2209 = vpack.c.b16 %v2169, %v2168
        %v2210 = vpack.c.b16 %v2171, %v2170
        %v2211 = vpack.c.b16 %v2173, %v2172
        %v2212 = vpack.c.b16 %v2175, %v2174
        %v2213 = vpack.c.b16 %v2177, %v2176
        %v2214 = vpack.c.b16 %v2179, %v2178
        %v2215 = vpack.c.b16 %v2181, %v2180
        %v2216 = vpack.c.b16 %v2183, %v2182
        %v2217 = vpack.c.b16 %v2185, %v2184
        %2250 = vmatprep.subr.bf16.mxu0 0
        %2251 = vmatpush1.bf16.msra.mxu0 %v2186
        %2252 = vmatprep.subr.bf16.mxu0 0
        %2253 = vmatpush1.bf16.msra.mxu0 %v2187
        %2254 = vmatprep.subr.bf16.mxu0 0
        %2255 = vmatpush1.bf16.msra.mxu0 %v2188
        %2256 = vmatprep.subr.bf16.mxu0 0
        %2257 = vmatpush1.bf16.msra.mxu0 %v2189
        %2258 = vmatprep.subr.bf16.mxu0 0
        %2259 = vmatpush1.bf16.msra.mxu0 %v2190
        %2260 = vmatprep.subr.bf16.mxu0 0
        %2261 = vmatpush1.bf16.msra.mxu0 %v2191
        %2262 = vmatprep.subr.bf16.mxu0 0
        %2263 = vmatpush1.bf16.msra.mxu0 %v2192
        %2264 = vmatprep.subr.bf16.mxu0 0
        %2265 = vmatpush1.bf16.msra.mxu0 %v2193
        %2266 = vmatprep.subr.bf16.mxu0 0
        %2267 = vmatpush1.bf16.msra.mxu0 %v2194
        %2268 = vmatprep.subr.bf16.mxu0 0
        %2269 = vmatpush1.bf16.msra.mxu0 %v2195
        %2270 = vmatprep.subr.bf16.mxu0 0
        %2271 = vmatpush1.bf16.msra.mxu0 %v2196
        %2272 = vmatprep.subr.bf16.mxu0 0
        %2273 = vmatpush1.bf16.msra.mxu0 %v2197
        %2274 = vmatprep.subr.bf16.mxu0 0
        %2275 = vmatpush1.bf16.msra.mxu0 %v2198
        %2276 = vmatprep.subr.bf16.mxu0 0
        %2277 = vmatpush1.bf16.msra.mxu0 %v2199
        %2278 = vmatprep.subr.bf16.mxu0 0
        %2279 = vmatpush1.bf16.msra.mxu0 %v2200
        %2280 = vmatprep.subr.bf16.mxu0 0
        %2281 = vmatpush1.bf16.msra.mxu0 %v2201
        %2282 = vmatprep.mubr.bf16.mxu0 %v1984
        %2283 = vmatmul.mubr.bf16.gmra.mrb[0].mxu0 %v1983
        %v2284 = vpop.f32.mrb[0].mxu0
        %v2285 = vadd.f32 %v2056, %v2284
        %v2286 = vpop.f32.mrb[0].mxu0
        %v2287 = vpop.f32.mrb[0].mxu0
        %v2288 = vpop.f32.mrb[0].mxu0
        %2289 = vdwg.mxu0
        %2290 = vmatprep.subr.bf16.mxu0 0
        %2291 = vmatpush1.bf16.msra.mxu0 %v2202
        %2292 = vmatprep.subr.bf16.mxu0 0
        %2293 = vmatpush1.bf16.msra.mxu0 %v2203
        %2294 = vmatprep.subr.bf16.mxu0 0
        %2295 = vmatpush1.bf16.msra.mxu0 %v2204
        %2296 = vmatprep.subr.bf16.mxu0 0
        %2297 = vmatpush1.bf16.msra.mxu0 %v2205
        %2298 = vmatprep.subr.bf16.mxu0 0
        %2299 = vmatpush1.bf16.msra.mxu0 %v2206
        %2300 = vmatprep.subr.bf16.mxu0 0
        %2301 = vmatpush1.bf16.msra.mxu0 %v2207
        %2302 = vmatprep.subr.bf16.mxu0 0
        %2303 = vmatpush1.bf16.msra.mxu0 %v2208
        %2304 = vmatprep.subr.bf16.mxu0 0
        %2305 = vmatpush1.bf16.msra.mxu0 %v2209
        %2306 = vmatprep.subr.bf16.mxu0 0
        %2307 = vmatpush1.bf16.msra.mxu0 %v2210
        %2308 = vmatprep.subr.bf16.mxu0 0
        %2309 = vmatpush1.bf16.msra.mxu0 %v2211
        %2310 = vmatprep.subr.bf16.mxu0 0
        %2311 = vmatpush1.bf16.msra.mxu0 %v2212
        %2312 = vmatprep.subr.bf16.mxu0 0
        %2313 = vmatpush1.bf16.msra.mxu0 %v2213
        %2314 = vmatprep.subr.bf16.mxu0 0
        %2315 = vmatpush1.bf16.msra.mxu0 %v2214
        %2316 = vmatprep.subr.bf16.mxu0 0
        %2317 = vmatpush1.bf16.msra.mxu0 %v2215
        %2318 = vmatprep.subr.bf16.mxu0 0
        %2319 = vmatpush1.bf16.msra.mxu0 %v2216
        %2320 = vmatprep.subr.bf16.mxu0 0
        %2321 = vmatpush1.bf16.msra.mxu0 %v2217
        %2322 = vmatprep.mubr.bf16.mxu0 %v1986
        %2323 = vmatmul.mubr.bf16.gmra.mrb[0].mxu0 %v1985
        %v2324 = vpop.f32.mrb[0].mxu0
        %v2325 = vadd.f32 %v2285, %v2324
        %v2326 = vpop.f32.mrb[0].mxu0
        %v2327 = vpop.f32.mrb[0].mxu0
        %v2328 = vpop.f32.mrb[0].mxu0
        %2329 = vdwg.mxu0
        %v2330 = vmax.f32 %v2325, 0.0
        %vm2331 = vcmask 31744
        %2332 = vst.msk [vmem:[%s308] sm:$0xff] %vm2331, %v2330
        %p2333 = scmp.lt.s32.totalorder %s19, 1
        %s2334 = scalar_select %p2333, %s19, 1
        %s2335 = smul.addr %s2334, 8
        %s2336 = scalar_lea.vmem %s7, %s2335
        // Predicated region
        $region53: #{tpu_custom_call.1} parent=47 // pred_check
          %p2337 = pneg %p194
        $region54: #{tpu_custom_call.1} parent=47 // pred_check_branch
          %2339 = sbr.rel (%p2337) target = $region56
        $region55: #{tpu_custom_call.1} parent=47 // pred_region
          _
        $region56: #{tpu_custom_call.1} parent=47 // pred_fallthru
          _
      $region48: #{tpu_custom_call.1} parent=5 // pred_fallthru
        _
      %p2340 = scmp.le.s32.totalorder 2, %s14
      // Predicated region
      $region57: #{tpu_custom_call.1} parent=5 // pred_check
        %p2341 = pneg %p2340
      $region58: #{tpu_custom_call.1} parent=5 // pred_check_branch
        %2343 = sbr.rel (%p2341) target = $region60
      $region59: #{tpu_custom_call.1} parent=5 // pred_region
        %s2344 = ssub.s32 %s14, 2
        // Predicated region
        $region61: #{tpu_custom_call.1} parent=59 // pred_check
          %p2345 = pneg %p200
        $region62: #{tpu_custom_call.1} parent=59 // pred_check_branch
          %2347 = sbr.rel (%p2345) target = $region64
        $region63: #{tpu_custom_call.1} parent=59 // pred_region
          %p2348 = scmp.lt.s32.totalorder %s20, 1
          %s2349 = scalar_select %p2348, %s20, 1
          %s2350 = smul.addr %s2349, 8
          %s2351 = scalar_lea.vmem %s7, %s2350
        $region64: #{tpu_custom_call.1} parent=59 // pred_fallthru
          _
      $region60: #{tpu_custom_call.1} parent=5 // pred_fallthru
        _
    $region6: #{tpu_custom_call.1} parent=1 // loop_footer
      %s18 = sadd.s32 1, %s14
    $region7: #{tpu_custom_call.1} parent=1 // loop_footer_branch
      %13 = sbr.rel target = $region3
    $region8: #{tpu_custom_call.1} parent=1 // loop_exit
      _
    %2352 = vsyncpa [#allocation3], 1
    %s2353 = scalar_lea.sflag [#allocation3], 1
    %2354 = vsyncpa %s2353, 1

</llo_original>
